<compile_context>
chip_gen: v6e
topology: v6e:2x2x1
jax: 0.10.0
libtpu: 0.0.40
codegen_flags: <defaults>
</compile_context>

<pallas_src>
import jax
import jax.numpy as jnp
from jax.experimental import pallas as pl
from jax.experimental.pallas import tpu as pltpu


def se_gate_kernel(gate_ref, x_ref, o_ref):
    # gate_ref: (rows, 1) ; x_ref / o_ref: (rows, cols)
    g = jax.nn.sigmoid(gate_ref[...].astype(jnp.float32))   # tiny, EUP exp
    x = x_ref[...]
    if jnp.issubdtype(x.dtype, jnp.floating):
        # Broadcast multiply in the activation dtype (halves vreg / ld-st
        # traffic for bf16 on v6e/v7x; no-op casts for f32).
        o_ref[...] = (g.astype(x.dtype) * x).astype(o_ref.dtype)
    else:
        o_ref[...] = (g * x.astype(jnp.float32)).astype(o_ref.dtype)


def _vmem_capacity_bytes():
    try:
        return int(pltpu.get_tpu_info().vmem_capacity_bytes)
    except Exception:
        return 64 * 1024 * 1024  # conservative (v7x per-TC)


def _choose_tiling(nc, hw, itemsize, vmem_bytes):
    """Returns (block_rows, block_cols) for the (nc, hw) flattened view."""
    # Generation-aware block cap: ~vmem/24 leaves headroom for 2x(in+out)
    # double-buffered blocks + gate + compiler scratch.
    max_block_bytes = max(512 * 1024, vmem_bytes // 24)
    sub = max(8, (8 * 4) // itemsize)         # 8 f32, 16 bf16/f16, 32 int8
    total = nc * hw * itemsize

    # Small tensor: per-step (~0.35 us) overhead dominates -> single block.
    if total <= 2 * 1024 * 1024:
        return nc, hw

    bytes_per_row = hw * itemsize
    row_budget = max_block_bytes // bytes_per_row
    if row_budget >= sub:
        rows = min((row_budget // sub) * sub, ((nc + sub - 1) // sub) * sub)
        # Aim for >= 4 row steps (>= 2 per TensorCore on dual-TC chips) while
        # keeping each block >= ~512 KiB.
        while (pl.cdiv(nc, rows) < 4 and rows > sub
               and (rows // 2) * bytes_per_row >= 512 * 1024):
            rows = max(sub, ((rows // 2) // sub) * sub)
        if rows >= nc:
            rows = nc                         # full extent is always legal
        return rows, hw

    # Rows alone can't satisfy the cap (huge H*W): tile lanes in 128-multiples.
    rows = min(nc, sub)
    col_budget = max_block_bytes // (rows * itemsize)
    cols = max(128, (col_budget // 128) * 128)
    cols = min(cols, hw)
    if cols >= hw:
        cols = hw
    return rows, cols


def sigmoid_mul(x364, x360):
    """sigmoid(x364) * x360 with NCHW inputs; x364 is (N, C, 1, 1)."""
    N, C, H, W = x360.shape
    assert x364.shape == (N, C, 1, 1)
    NC, HW = N * C, H * W

    gate2d = x364.reshape(NC, 1)
    x2d = x360.reshape(NC, HW)

    itemsize = jnp.dtype(x360.dtype).itemsize
    vmem_bytes = _vmem_capacity_bytes()
    rows, cols = _choose_tiling(NC, HW, itemsize, vmem_bytes)
    grid = (pl.cdiv(NC, rows), pl.cdiv(HW, cols))

    block_bytes = rows * cols * itemsize
    vmem_limit = int(min(0.75 * vmem_bytes,
                         max(32 * 1024 * 1024, 6 * block_bytes)))

    out2d = pl.pallas_call(
        se_gate_kernel,
        out_shape=jax.ShapeDtypeStruct((NC, HW), x360.dtype),
        grid_spec=pltpu.PrefetchScalarGridSpec(
            num_scalar_prefetch=0,
            grid=grid,
            in_specs=[
                pl.BlockSpec((rows, 1), lambda i, j: (i, 0)),     # gate tile
                pl.BlockSpec((rows, cols), lambda i, j: (i, j)),  # x tile
            ],
            out_specs=pl.BlockSpec((rows, cols), lambda i, j: (i, j)),
        ),
        compiler_params=pltpu.CompilerParams(
            # All tiles are independent -> megacore-shardable on v7x,
            # harmless on single-TC v5e/v6e.
            dimension_semantics=("parallel", "parallel"),
            vmem_limit_bytes=vmem_limit,
        ),
    )(gate2d, x2d)

    return out2d.reshape(N, C, H, W)


if __name__ == "__main__":
    key = jax.random.PRNGKey(0)
    k1, k2 = jax.random.split(key)

    # Shapes from the module: x360 = (1, 864, 14, 14), x364 = (1, 864, 1, 1)
    N, C, H, W = 1, 864, 14, 14
    x360 = jax.random.normal(k1, (N, C, H, W), dtype=jnp.float32)
    x364 = jax.random.normal(k2, (N, C, 1, 1), dtype=jnp.float32)

    out = sigmoid_mul(x364, x360)
    out = jax.block_until_ready(out)

    # Reference check in plain JAX
    ref = jax.nn.sigmoid(x364) * x360
    assert out.shape == (N, C, H, W)
    assert jnp.allclose(out, ref, atol=1e-6, rtol=1e-6)

    print("KERNEL_OK")
</pallas_src>

<mosaic_0001>
module attributes {stable_mosaic.version = 11 : i64} {
  func.func @se_gate_kernel(%arg0: i32, %arg1: i32, %arg2: memref<864x1xf32, #tpu.memory_space<vmem>>, %arg3: memref<864x196xf32, #tpu.memory_space<vmem>>, %arg4: memref<864x196xf32, #tpu.memory_space<vmem>>) attributes {dimension_semantics = [#tpu.dimension_semantics<parallel>, #tpu.dimension_semantics<parallel>], iteration_bounds = array<i64: 1, 1>, scalar_prefetch = 0 : i64, scratch_operands = 0 : i64, tpu.core_type = #tpu.core_type<tc>, window_params = [{transform_indices = @transform_0, window_bounds = array<i64: 864, 1>}, {transform_indices = @transform_1, window_bounds = array<i64: 864, 196>}, {transform_indices = @transform_2, window_bounds = array<i64: 864, 196>}]} {
    %c0 = arith.constant 0 : index
    %c0_0 = arith.constant 0 : index
    %0 = vector.load %arg2[%c0, %c0_0] : memref<864x1xf32, #tpu.memory_space<vmem>>, vector<864x1xf32>
    %1 = arith.negf %0 : vector<864x1xf32>
    %2 = math.exp %1 : vector<864x1xf32>
    %cst = arith.constant 1.000000e+00 : f32
    %3 = vector.broadcast %cst : f32 to vector<864x1xf32>
    %4 = arith.addf %3, %2 : vector<864x1xf32>
    %5 = arith.divf %3, %4 : vector<864x1xf32>
    %c0_1 = arith.constant 0 : index
    %c0_2 = arith.constant 0 : index
    %6 = vector.load %arg3[%c0_1, %c0_2] : memref<864x196xf32, #tpu.memory_space<vmem>>, vector<864x196xf32>
    %7 = vector.broadcast %5 : vector<864x1xf32> to vector<864x196xf32>
    %8 = arith.mulf %7, %6 : vector<864x196xf32>
    %c0_3 = arith.constant 0 : index
    %c0_4 = arith.constant 0 : index
    %9 = vector.load %arg4[%c0_3, %c0_4] : memref<864x196xf32, #tpu.memory_space<vmem>>, vector<864x196xf32>
    tpu.vector_store %arg4[%c0_3, %c0_4], %8 {strides = array<i32>} : memref<864x196xf32, #tpu.memory_space<vmem>>, vector<864x196xf32>,
    return
  }
  func.func @transform_0(%arg0: i32, %arg1: i32) -> (i32, i32) {
    %c0_i32 = arith.constant 0 : i32
    %c0_i32_0 = arith.constant 0 : i32
    return %arg0, %c0_i32 : i32, i32
  }
  func.func @transform_1(%arg0: i32, %arg1: i32) -> (i32, i32) {
    %c0_i32 = arith.constant 0 : i32
    return %arg0, %arg1 : i32, i32
  }
  func.func @transform_2(%arg0: i32, %arg1: i32) -> (i32, i32) {
    %c0_i32 = arith.constant 0 : i32
    return %arg0, %arg1 : i32, i32
  }
}

</mosaic_0001>

<llo_original>
// kernel: tpu_custom_call.1
$region0: #{tpu_custom_call.1}
  #allocation0 [shape = 'u32[]', space=smem, size = 0x4, offset = 0x4, fixed_abs, tag = 'smem constant byte address 0x4 - core index']
  #allocation1 [shape = 'u32[144,128]{1,0:T(1,128)}', space=vmem, size = 0x12000, scoped, tag = 'internal scratch']
  %s0 = inlined_call_operand.vmem [shape: f32[864,1], index: 0, kind: input, shape index: {}]
  %s1 = inlined_call_operand.vmem [shape: f32[864,196], index: 1, kind: input, shape index: {}]
  %s2 = inlined_call_operand.vmem [shape: f32[864,196], index: 2, kind: output, shape index: {}]
  %s3 = sld [smem:[#allocation0]]
  $region18: #{tpu_custom_call.1} parent=0
    _
  %s5 = ssub.s32 1, %s3
  %s6 = scalar_select 0, %s5, %s3
  // Predicated region
  $region2: #{tpu_custom_call.1} parent=0 // pred_check
    _
  $region3: #{tpu_custom_call.1} parent=0 // pred_check_branch
    %8 = sbr.rel (0) target = $region5
  $region4: #{tpu_custom_call.1} parent=0 // pred_region
    _
  $region5: #{tpu_custom_call.1} parent=0 // pred_fallthru
    _
  // Predicated region
  $region6: #{tpu_custom_call.1} parent=0 // pred_check
    _
  $region7: #{tpu_custom_call.1} parent=0 // pred_check_branch
    %10 = sbr.rel (0) target = $region9
  $region8: #{tpu_custom_call.1} parent=0 // pred_region
    _
  $region9: #{tpu_custom_call.1} parent=0 // pred_fallthru
    _
  %v11 = vld [vmem:[%s0] sm:$0xff]
  %v12 = vld [vmem:[%s0 + $0x8] sm:$0xff]
  %v13 = vld [vmem:[%s0 + $0x10] sm:$0xff]
  %v14 = vld [vmem:[%s0 + $0x18] sm:$0xff]
  %v15 = vld [vmem:[%s0 + $0x20] sm:$0xff]
  %v16 = vld [vmem:[%s0 + $0x28] sm:$0xff]
  %v17 = vld [vmem:[%s0 + $0x30] sm:$0xff]
  %v18 = vld [vmem:[%s0 + $0x38] sm:$0xff]
  %v19 = vld [vmem:[%s0 + $0x40] sm:$0xff]
  %v20 = vld [vmem:[%s0 + $0x48] sm:$0xff]
  %v21 = vld [vmem:[%s0 + $0x50] sm:$0xff]
  %v22 = vld [vmem:[%s0 + $0x58] sm:$0xff]
  %v23 = vld [vmem:[%s0 + $0x60] sm:$0xff]
  %v24 = vld [vmem:[%s0 + $0x68] sm:$0xff]
  %v25 = vld [vmem:[%s0 + $0x70] sm:$0xff]
  %v26 = vld [vmem:[%s0 + $0x78] sm:$0xff]
  %v27 = vld [vmem:[%s0 + $0x80] sm:$0xff]
  %v28 = vld [vmem:[%s0 + $0x88] sm:$0xff]
  %v29 = vld [vmem:[%s0 + $0x90] sm:$0xff]
  %v30 = vld [vmem:[%s0 + $0x98] sm:$0xff]
  %v31 = vld [vmem:[%s0 + $0xa0] sm:$0xff]
  %v32 = vld [vmem:[%s0 + $0xa8] sm:$0xff]
  %v33 = vld [vmem:[%s0 + $0xb0] sm:$0xff]
  %v34 = vld [vmem:[%s0 + $0xb8] sm:$0xff]
  %v35 = vld [vmem:[%s0 + $0xc0] sm:$0xff]
  %v36 = vld [vmem:[%s0 + $0xc8] sm:$0xff]
  %v37 = vld [vmem:[%s0 + $0xd0] sm:$0xff]
  %v38 = vld [vmem:[%s0 + $0xd8] sm:$0xff]
  %v39 = vld [vmem:[%s0 + $0xe0] sm:$0xff]
  %v40 = vld [vmem:[%s0 + $0xe8] sm:$0xff]
  %v41 = vld [vmem:[%s0 + $0xf0] sm:$0xff]
  %v42 = vld [vmem:[%s0 + $0xf8] sm:$0xff]
  %v43 = vld [vmem:[%s0 + $0x100] sm:$0xff]
  %v44 = vld [vmem:[%s0 + $0x108] sm:$0xff]
  %v45 = vld [vmem:[%s0 + $0x110] sm:$0xff]
  %v46 = vld [vmem:[%s0 + $0x118] sm:$0xff]
  %v47 = vld [vmem:[%s0 + $0x120] sm:$0xff]
  %v48 = vld [vmem:[%s0 + $0x128] sm:$0xff]
  %v49 = vld [vmem:[%s0 + $0x130] sm:$0xff]
  %v50 = vld [vmem:[%s0 + $0x138] sm:$0xff]
  %v51 = vld [vmem:[%s0 + $0x140] sm:$0xff]
  %v52 = vld [vmem:[%s0 + $0x148] sm:$0xff]
  %v53 = vld [vmem:[%s0 + $0x150] sm:$0xff]
  %v54 = vld [vmem:[%s0 + $0x158] sm:$0xff]
  %v55 = vld [vmem:[%s0 + $0x160] sm:$0xff]
  %v56 = vld [vmem:[%s0 + $0x168] sm:$0xff]
  %v57 = vld [vmem:[%s0 + $0x170] sm:$0xff]
  %v58 = vld [vmem:[%s0 + $0x178] sm:$0xff]
  %v59 = vld [vmem:[%s0 + $0x180] sm:$0xff]
  %v60 = vld [vmem:[%s0 + $0x188] sm:$0xff]
  %v61 = vld [vmem:[%s0 + $0x190] sm:$0xff]
  %v62 = vld [vmem:[%s0 + $0x198] sm:$0xff]
  %v63 = vld [vmem:[%s0 + $0x1a0] sm:$0xff]
  %v64 = vld [vmem:[%s0 + $0x1a8] sm:$0xff]
  %v65 = vld [vmem:[%s0 + $0x1b0] sm:$0xff]
  %v66 = vld [vmem:[%s0 + $0x1b8] sm:$0xff]
  %v67 = vld [vmem:[%s0 + $0x1c0] sm:$0xff]
  %v68 = vld [vmem:[%s0 + $0x1c8] sm:$0xff]
  %v69 = vld [vmem:[%s0 + $0x1d0] sm:$0xff]
  %v70 = vld [vmem:[%s0 + $0x1d8] sm:$0xff]
  %v71 = vld [vmem:[%s0 + $0x1e0] sm:$0xff]
  %v72 = vld [vmem:[%s0 + $0x1e8] sm:$0xff]
  %v73 = vld [vmem:[%s0 + $0x1f0] sm:$0xff]
  %v74 = vld [vmem:[%s0 + $0x1f8] sm:$0xff]
  %v75 = vld [vmem:[%s0 + $0x200] sm:$0xff]
  %v76 = vld [vmem:[%s0 + $0x208] sm:$0xff]
  %v77 = vld [vmem:[%s0 + $0x210] sm:$0xff]
  %v78 = vld [vmem:[%s0 + $0x218] sm:$0xff]
  %v79 = vld [vmem:[%s0 + $0x220] sm:$0xff]
  %v80 = vld [vmem:[%s0 + $0x228] sm:$0xff]
  %v81 = vld [vmem:[%s0 + $0x230] sm:$0xff]
  %v82 = vld [vmem:[%s0 + $0x238] sm:$0xff]
  %v83 = vld [vmem:[%s0 + $0x240] sm:$0xff]
  %v84 = vld [vmem:[%s0 + $0x248] sm:$0xff]
  %v85 = vld [vmem:[%s0 + $0x250] sm:$0xff]
  %v86 = vld [vmem:[%s0 + $0x258] sm:$0xff]
  %v87 = vld [vmem:[%s0 + $0x260] sm:$0xff]
  %v88 = vld [vmem:[%s0 + $0x268] sm:$0xff]
  %v89 = vld [vmem:[%s0 + $0x270] sm:$0xff]
  %v90 = vld [vmem:[%s0 + $0x278] sm:$0xff]
  %v91 = vld [vmem:[%s0 + $0x280] sm:$0xff]
  %v92 = vld [vmem:[%s0 + $0x288] sm:$0xff]
  %v93 = vld [vmem:[%s0 + $0x290] sm:$0xff]
  %v94 = vld [vmem:[%s0 + $0x298] sm:$0xff]
  %v95 = vld [vmem:[%s0 + $0x2a0] sm:$0xff]
  %v96 = vld [vmem:[%s0 + $0x2a8] sm:$0xff]
  %v97 = vld [vmem:[%s0 + $0x2b0] sm:$0xff]
  %v98 = vld [vmem:[%s0 + $0x2b8] sm:$0xff]
  %v99 = vld [vmem:[%s0 + $0x2c0] sm:$0xff]
  %v100 = vld [vmem:[%s0 + $0x2c8] sm:$0xff]
  %v101 = vld [vmem:[%s0 + $0x2d0] sm:$0xff]
  %v102 = vld [vmem:[%s0 + $0x2d8] sm:$0xff]
  %v103 = vld [vmem:[%s0 + $0x2e0] sm:$0xff]
  %v104 = vld [vmem:[%s0 + $0x2e8] sm:$0xff]
  %v105 = vld [vmem:[%s0 + $0x2f0] sm:$0xff]
  %v106 = vld [vmem:[%s0 + $0x2f8] sm:$0xff]
  %v107 = vld [vmem:[%s0 + $0x300] sm:$0xff]
  %v108 = vld [vmem:[%s0 + $0x308] sm:$0xff]
  %v109 = vld [vmem:[%s0 + $0x310] sm:$0xff]
  %v110 = vld [vmem:[%s0 + $0x318] sm:$0xff]
  %v111 = vld [vmem:[%s0 + $0x320] sm:$0xff]
  %v112 = vld [vmem:[%s0 + $0x328] sm:$0xff]
  %v113 = vld [vmem:[%s0 + $0x330] sm:$0xff]
  %v114 = vld [vmem:[%s0 + $0x338] sm:$0xff]
  %v115 = vld [vmem:[%s0 + $0x340] sm:$0xff]
  %v116 = vld [vmem:[%s0 + $0x348] sm:$0xff]
  %v117 = vld [vmem:[%s0 + $0x350] sm:$0xff]
  %v118 = vld [vmem:[%s0 + $0x358] sm:$0xff]
  %v119 = vxor.u32 %v11, 2147483648
  %v120 = vxor.u32 %v12, 2147483648
  %v121 = vxor.u32 %v13, 2147483648
  %v122 = vxor.u32 %v14, 2147483648
  %v123 = vxor.u32 %v15, 2147483648
  %v124 = vxor.u32 %v16, 2147483648
  %v125 = vxor.u32 %v17, 2147483648
  %v126 = vxor.u32 %v18, 2147483648
  %v127 = vxor.u32 %v19, 2147483648
  %v128 = vxor.u32 %v20, 2147483648
  %v129 = vxor.u32 %v21, 2147483648
  %v130 = vxor.u32 %v22, 2147483648
  %v131 = vxor.u32 %v23, 2147483648
  %v132 = vxor.u32 %v24, 2147483648
  %v133 = vxor.u32 %v25, 2147483648
  %v134 = vxor.u32 %v26, 2147483648
  %v135 = vxor.u32 %v27, 2147483648
  %v136 = vxor.u32 %v28, 2147483648
  %v137 = vxor.u32 %v29, 2147483648
  %v138 = vxor.u32 %v30, 2147483648
  %v139 = vxor.u32 %v31, 2147483648
  %v140 = vxor.u32 %v32, 2147483648
  %v141 = vxor.u32 %v33, 2147483648
  %v142 = vxor.u32 %v34, 2147483648
  %v143 = vxor.u32 %v35, 2147483648
  %v144 = vxor.u32 %v36, 2147483648
  %v145 = vxor.u32 %v37, 2147483648
  %v146 = vxor.u32 %v38, 2147483648
  %v147 = vxor.u32 %v39, 2147483648
  %v148 = vxor.u32 %v40, 2147483648
  %v149 = vxor.u32 %v41, 2147483648
  %v150 = vxor.u32 %v42, 2147483648
  %v151 = vxor.u32 %v43, 2147483648
  %v152 = vxor.u32 %v44, 2147483648
  %v153 = vxor.u32 %v45, 2147483648
  %v154 = vxor.u32 %v46, 2147483648
  %v155 = vxor.u32 %v47, 2147483648
  %v156 = vxor.u32 %v48, 2147483648
  %v157 = vxor.u32 %v49, 2147483648
  %v158 = vxor.u32 %v50, 2147483648
  %v159 = vxor.u32 %v51, 2147483648
  %v160 = vxor.u32 %v52, 2147483648
  %v161 = vxor.u32 %v53, 2147483648
  %v162 = vxor.u32 %v54, 2147483648
  %v163 = vxor.u32 %v55, 2147483648
  %v164 = vxor.u32 %v56, 2147483648
  %v165 = vxor.u32 %v57, 2147483648
  %v166 = vxor.u32 %v58, 2147483648
  %v167 = vxor.u32 %v59, 2147483648
  %v168 = vxor.u32 %v60, 2147483648
  %v169 = vxor.u32 %v61, 2147483648
  %v170 = vxor.u32 %v62, 2147483648
  %v171 = vxor.u32 %v63, 2147483648
  %v172 = vxor.u32 %v64, 2147483648
  %v173 = vxor.u32 %v65, 2147483648
  %v174 = vxor.u32 %v66, 2147483648
  %v175 = vxor.u32 %v67, 2147483648
  %v176 = vxor.u32 %v68, 2147483648
  %v177 = vxor.u32 %v69, 2147483648
  %v178 = vxor.u32 %v70, 2147483648
  %v179 = vxor.u32 %v71, 2147483648
  %v180 = vxor.u32 %v72, 2147483648
  %v181 = vxor.u32 %v73, 2147483648
  %v182 = vxor.u32 %v74, 2147483648
  %v183 = vxor.u32 %v75, 2147483648
  %v184 = vxor.u32 %v76, 2147483648
  %v185 = vxor.u32 %v77, 2147483648
  %v186 = vxor.u32 %v78, 2147483648
  %v187 = vxor.u32 %v79, 2147483648
  %v188 = vxor.u32 %v80, 2147483648
  %v189 = vxor.u32 %v81, 2147483648
  %v190 = vxor.u32 %v82, 2147483648
  %v191 = vxor.u32 %v83, 2147483648
  %v192 = vxor.u32 %v84, 2147483648
  %v193 = vxor.u32 %v85, 2147483648
  %v194 = vxor.u32 %v86, 2147483648
  %v195 = vxor.u32 %v87, 2147483648
  %v196 = vxor.u32 %v88, 2147483648
  %v197 = vxor.u32 %v89, 2147483648
  %v198 = vxor.u32 %v90, 2147483648
  %v199 = vxor.u32 %v91, 2147483648
  %v200 = vxor.u32 %v92, 2147483648
  %v201 = vxor.u32 %v93, 2147483648
  %v202 = vxor.u32 %v94, 2147483648
  %v203 = vxor.u32 %v95, 2147483648
  %v204 = vxor.u32 %v96, 2147483648
  %v205 = vxor.u32 %v97, 2147483648
  %v206 = vxor.u32 %v98, 2147483648
  %v207 = vxor.u32 %v99, 2147483648
  %v208 = vxor.u32 %v100, 2147483648
  %v209 = vxor.u32 %v101, 2147483648
  %v210 = vxor.u32 %v102, 2147483648
  %v211 = vxor.u32 %v103, 2147483648
  %v212 = vxor.u32 %v104, 2147483648
  %v213 = vxor.u32 %v105, 2147483648
  %v214 = vxor.u32 %v106, 2147483648
  %v215 = vxor.u32 %v107, 2147483648
  %v216 = vxor.u32 %v108, 2147483648
  %v217 = vxor.u32 %v109, 2147483648
  %v218 = vxor.u32 %v110, 2147483648
  %v219 = vxor.u32 %v111, 2147483648
  %v220 = vxor.u32 %v112, 2147483648
  %v221 = vxor.u32 %v113, 2147483648
  %v222 = vxor.u32 %v114, 2147483648
  %v223 = vxor.u32 %v115, 2147483648
  %v224 = vxor.u32 %v116, 2147483648
  %v225 = vxor.u32 %v117, 2147483648
  %v226 = vxor.u32 %v118, 2147483648
  %v227 = vmul.f32 %v119, 1.442695
  %v228 = vpow.pop %v227
  %v229 = vmul.f32 %v120, 1.442695
  %v230 = vpow.pop %v229
  %v231 = vmul.f32 %v121, 1.442695
  %v232 = vpow.pop %v231
  %v233 = vmul.f32 %v122, 1.442695
  %v234 = vpow.pop %v233
  %v235 = vmul.f32 %v123, 1.442695
  %v236 = vpow.pop %v235
  %v237 = vmul.f32 %v124, 1.442695
  %v238 = vpow.pop %v237
  %v239 = vmul.f32 %v125, 1.442695
  %v240 = vpow.pop %v239
  %v241 = vmul.f32 %v126, 1.442695
  %v242 = vpow.pop %v241
  %v243 = vmul.f32 %v127, 1.442695
  %v244 = vpow.pop %v243
  %v245 = vmul.f32 %v128, 1.442695
  %v246 = vpow.pop %v245
  %v247 = vmul.f32 %v129, 1.442695
  %v248 = vpow.pop %v247
  %v249 = vmul.f32 %v130, 1.442695
  %v250 = vpow.pop %v249
  %v251 = vmul.f32 %v131, 1.442695
  %v252 = vpow.pop %v251
  %v253 = vmul.f32 %v132, 1.442695
  %v254 = vpow.pop %v253
  %v255 = vmul.f32 %v133, 1.442695
  %v256 = vpow.pop %v255
  %v257 = vmul.f32 %v134, 1.442695
  %v258 = vpow.pop %v257
  %v259 = vmul.f32 %v135, 1.442695
  %v260 = vpow.pop %v259
  %v261 = vmul.f32 %v136, 1.442695
  %v262 = vpow.pop %v261
  %v263 = vmul.f32 %v137, 1.442695
  %v264 = vpow.pop %v263
  %v265 = vmul.f32 %v138, 1.442695
  %v266 = vpow.pop %v265
  %v267 = vmul.f32 %v139, 1.442695
  %v268 = vpow.pop %v267
  %v269 = vmul.f32 %v140, 1.442695
  %v270 = vpow.pop %v269
  %v271 = vmul.f32 %v141, 1.442695
  %v272 = vpow.pop %v271
  %v273 = vmul.f32 %v142, 1.442695
  %v274 = vpow.pop %v273
  %v275 = vmul.f32 %v143, 1.442695
  %v276 = vpow.pop %v275
  %v277 = vmul.f32 %v144, 1.442695
  %v278 = vpow.pop %v277
  %v279 = vmul.f32 %v145, 1.442695
  %v280 = vpow.pop %v279
  %v281 = vmul.f32 %v146, 1.442695
  %v282 = vpow.pop %v281
  %v283 = vmul.f32 %v147, 1.442695
  %v284 = vpow.pop %v283
  %v285 = vmul.f32 %v148, 1.442695
  %v286 = vpow.pop %v285
  %v287 = vmul.f32 %v149, 1.442695
  %v288 = vpow.pop %v287
  %v289 = vmul.f32 %v150, 1.442695
  %v290 = vpow.pop %v289
  %v291 = vmul.f32 %v151, 1.442695
  %v292 = vpow.pop %v291
  %v293 = vmul.f32 %v152, 1.442695
  %v294 = vpow.pop %v293
  %v295 = vmul.f32 %v153, 1.442695
  %v296 = vpow.pop %v295
  %v297 = vmul.f32 %v154, 1.442695
  %v298 = vpow.pop %v297
  %v299 = vmul.f32 %v155, 1.442695
  %v300 = vpow.pop %v299
  %v301 = vmul.f32 %v156, 1.442695
  %v302 = vpow.pop %v301
  %v303 = vmul.f32 %v157, 1.442695
  %v304 = vpow.pop %v303
  %v305 = vmul.f32 %v158, 1.442695
  %v306 = vpow.pop %v305
  %v307 = vmul.f32 %v159, 1.442695
  %v308 = vpow.pop %v307
  %v309 = vmul.f32 %v160, 1.442695
  %v310 = vpow.pop %v309
  %v311 = vmul.f32 %v161, 1.442695
  %v312 = vpow.pop %v311
  %v313 = vmul.f32 %v162, 1.442695
  %v314 = vpow.pop %v313
  %v315 = vmul.f32 %v163, 1.442695
  %v316 = vpow.pop %v315
  %v317 = vmul.f32 %v164, 1.442695
  %v318 = vpow.pop %v317
  %v319 = vmul.f32 %v165, 1.442695
  %v320 = vpow.pop %v319
  %v321 = vmul.f32 %v166, 1.442695
  %v322 = vpow.pop %v321
  %v323 = vmul.f32 %v167, 1.442695
  %v324 = vpow.pop %v323
  %v325 = vmul.f32 %v168, 1.442695
  %v326 = vpow.pop %v325
  %v327 = vmul.f32 %v169, 1.442695
  %v328 = vpow.pop %v327
  %v329 = vmul.f32 %v170, 1.442695
  %v330 = vpow.pop %v329
  %v331 = vmul.f32 %v171, 1.442695
  %v332 = vpow.pop %v331
  %v333 = vmul.f32 %v172, 1.442695
  %v334 = vpow.pop %v333
  %v335 = vmul.f32 %v173, 1.442695
  %v336 = vpow.pop %v335
  %v337 = vmul.f32 %v174, 1.442695
  %v338 = vpow.pop %v337
  %v339 = vmul.f32 %v175, 1.442695
  %v340 = vpow.pop %v339
  %v341 = vmul.f32 %v176, 1.442695
  %v342 = vpow.pop %v341
  %v343 = vmul.f32 %v177, 1.442695
  %v344 = vpow.pop %v343
  %v345 = vmul.f32 %v178, 1.442695
  %v346 = vpow.pop %v345
  %v347 = vmul.f32 %v179, 1.442695
  %v348 = vpow.pop %v347
  %v349 = vmul.f32 %v180, 1.442695
  %v350 = vpow.pop %v349
  %v351 = vmul.f32 %v181, 1.442695
  %v352 = vpow.pop %v351
  %v353 = vmul.f32 %v182, 1.442695
  %v354 = vpow.pop %v353
  %v355 = vmul.f32 %v183, 1.442695
  %v356 = vpow.pop %v355
  %v357 = vmul.f32 %v184, 1.442695
  %v358 = vpow.pop %v357
  %v359 = vmul.f32 %v185, 1.442695
  %v360 = vpow.pop %v359
  %v361 = vmul.f32 %v186, 1.442695
  %v362 = vpow.pop %v361
  %v363 = vmul.f32 %v187, 1.442695
  %v364 = vpow.pop %v363
  %v365 = vmul.f32 %v188, 1.442695
  %v366 = vpow.pop %v365
  %v367 = vmul.f32 %v189, 1.442695
  %v368 = vpow.pop %v367
  %v369 = vmul.f32 %v190, 1.442695
  %v370 = vpow.pop %v369
  %v371 = vmul.f32 %v191, 1.442695
  %v372 = vpow.pop %v371
  %v373 = vmul.f32 %v192, 1.442695
  %v374 = vpow.pop %v373
  %v375 = vmul.f32 %v193, 1.442695
  %v376 = vpow.pop %v375
  %v377 = vmul.f32 %v194, 1.442695
  %v378 = vpow.pop %v377
  %v379 = vmul.f32 %v195, 1.442695
  %v380 = vpow.pop %v379
  %v381 = vmul.f32 %v196, 1.442695
  %v382 = vpow.pop %v381
  %v383 = vmul.f32 %v197, 1.442695
  %v384 = vpow.pop %v383
  %v385 = vmul.f32 %v198, 1.442695
  %v386 = vpow.pop %v385
  %v387 = vmul.f32 %v199, 1.442695
  %v388 = vpow.pop %v387
  %v389 = vmul.f32 %v200, 1.442695
  %v390 = vpow.pop %v389
  %v391 = vmul.f32 %v201, 1.442695
  %v392 = vpow.pop %v391
  %v393 = vmul.f32 %v202, 1.442695
  %v394 = vpow.pop %v393
  %v395 = vmul.f32 %v203, 1.442695
  %v396 = vpow.pop %v395
  %v397 = vmul.f32 %v204, 1.442695
  %v398 = vpow.pop %v397
  %v399 = vmul.f32 %v205, 1.442695
  %v400 = vpow.pop %v399
  %v401 = vmul.f32 %v206, 1.442695
  %v402 = vpow.pop %v401
  %v403 = vmul.f32 %v207, 1.442695
  %v404 = vpow.pop %v403
  %v405 = vmul.f32 %v208, 1.442695
  %v406 = vpow.pop %v405
  %v407 = vmul.f32 %v209, 1.442695
  %v408 = vpow.pop %v407
  %v409 = vmul.f32 %v210, 1.442695
  %v410 = vpow.pop %v409
  %v411 = vmul.f32 %v211, 1.442695
  %v412 = vpow.pop %v411
  %v413 = vmul.f32 %v212, 1.442695
  %v414 = vpow.pop %v413
  %v415 = vmul.f32 %v213, 1.442695
  %v416 = vpow.pop %v415
  %v417 = vmul.f32 %v214, 1.442695
  %v418 = vpow.pop %v417
  %v419 = vmul.f32 %v215, 1.442695
  %v420 = vpow.pop %v419
  %v421 = vmul.f32 %v216, 1.442695
  %v422 = vpow.pop %v421
  %v423 = vmul.f32 %v217, 1.442695
  %v424 = vpow.pop %v423
  %v425 = vmul.f32 %v218, 1.442695
  %v426 = vpow.pop %v425
  %v427 = vmul.f32 %v219, 1.442695
  %v428 = vpow.pop %v427
  %v429 = vmul.f32 %v220, 1.442695
  %v430 = vpow.pop %v429
  %v431 = vmul.f32 %v221, 1.442695
  %v432 = vpow.pop %v431
  %v433 = vmul.f32 %v222, 1.442695
  %v434 = vpow.pop %v433
  %v435 = vmul.f32 %v223, 1.442695
  %v436 = vpow.pop %v435
  %v437 = vmul.f32 %v224, 1.442695
  %v438 = vpow.pop %v437
  %v439 = vmul.f32 %v225, 1.442695
  %v440 = vpow.pop %v439
  %v441 = vmul.f32 %v226, 1.442695
  %v442 = vpow.pop %v441
  %v443 = vadd.f32 %v228, 1.0
  %v444 = vadd.f32 %v230, 1.0
  %v445 = vadd.f32 %v232, 1.0
  %v446 = vadd.f32 %v234, 1.0
  %v447 = vadd.f32 %v236, 1.0
  %v448 = vadd.f32 %v238, 1.0
  %v449 = vadd.f32 %v240, 1.0
  %v450 = vadd.f32 %v242, 1.0
  %v451 = vadd.f32 %v244, 1.0
  %v452 = vadd.f32 %v246, 1.0
  %v453 = vadd.f32 %v248, 1.0
  %v454 = vadd.f32 %v250, 1.0
  %v455 = vadd.f32 %v252, 1.0
  %v456 = vadd.f32 %v254, 1.0
  %v457 = vadd.f32 %v256, 1.0
  %v458 = vadd.f32 %v258, 1.0
  %v459 = vadd.f32 %v260, 1.0
  %v460 = vadd.f32 %v262, 1.0
  %v461 = vadd.f32 %v264, 1.0
  %v462 = vadd.f32 %v266, 1.0
  %v463 = vadd.f32 %v268, 1.0
  %v464 = vadd.f32 %v270, 1.0
  %v465 = vadd.f32 %v272, 1.0
  %v466 = vadd.f32 %v274, 1.0
  %v467 = vadd.f32 %v276, 1.0
  %v468 = vadd.f32 %v278, 1.0
  %v469 = vadd.f32 %v280, 1.0
  %v470 = vadd.f32 %v282, 1.0
  %v471 = vadd.f32 %v284, 1.0
  %v472 = vadd.f32 %v286, 1.0
  %v473 = vadd.f32 %v288, 1.0
  %v474 = vadd.f32 %v290, 1.0
  %v475 = vadd.f32 %v292, 1.0
  %v476 = vadd.f32 %v294, 1.0
  %v477 = vadd.f32 %v296, 1.0
  %v478 = vadd.f32 %v298, 1.0
  %v479 = vadd.f32 %v300, 1.0
  %v480 = vadd.f32 %v302, 1.0
  %v481 = vadd.f32 %v304, 1.0
  %v482 = vadd.f32 %v306, 1.0
  %v483 = vadd.f32 %v308, 1.0
  %v484 = vadd.f32 %v310, 1.0
  %v485 = vadd.f32 %v312, 1.0
  %v486 = vadd.f32 %v314, 1.0
  %v487 = vadd.f32 %v316, 1.0
  %v488 = vadd.f32 %v318, 1.0
  %v489 = vadd.f32 %v320, 1.0
  %v490 = vadd.f32 %v322, 1.0
  %v491 = vadd.f32 %v324, 1.0
  %v492 = vadd.f32 %v326, 1.0
  %v493 = vadd.f32 %v328, 1.0
  %v494 = vadd.f32 %v330, 1.0
  %v495 = vadd.f32 %v332, 1.0
  %v496 = vadd.f32 %v334, 1.0
  %v497 = vadd.f32 %v336, 1.0
  %v498 = vadd.f32 %v338, 1.0
  %v499 = vadd.f32 %v340, 1.0
  %v500 = vadd.f32 %v342, 1.0
  %v501 = vadd.f32 %v344, 1.0
  %v502 = vadd.f32 %v346, 1.0
  %v503 = vadd.f32 %v348, 1.0
  %v504 = vadd.f32 %v350, 1.0
  %v505 = vadd.f32 %v352, 1.0
  %v506 = vadd.f32 %v354, 1.0
  %v507 = vadd.f32 %v356, 1.0
  %v508 = vadd.f32 %v358, 1.0
  %v509 = vadd.f32 %v360, 1.0
  %v510 = vadd.f32 %v362, 1.0
  %v511 = vadd.f32 %v364, 1.0
  %v512 = vadd.f32 %v366, 1.0
  %v513 = vadd.f32 %v368, 1.0
  %v514 = vadd.f32 %v370, 1.0
  %v515 = vadd.f32 %v372, 1.0
  %v516 = vadd.f32 %v374, 1.0
  %v517 = vadd.f32 %v376, 1.0
  %v518 = vadd.f32 %v378, 1.0
  %v519 = vadd.f32 %v380, 1.0
  %v520 = vadd.f32 %v382, 1.0
  %v521 = vadd.f32 %v384, 1.0
  %v522 = vadd.f32 %v386, 1.0
  %v523 = vadd.f32 %v388, 1.0
  %v524 = vadd.f32 %v390, 1.0
  %v525 = vadd.f32 %v392, 1.0
  %v526 = vadd.f32 %v394, 1.0
  %v527 = vadd.f32 %v396, 1.0
  %v528 = vadd.f32 %v398, 1.0
  %v529 = vadd.f32 %v400, 1.0
  %v530 = vadd.f32 %v402, 1.0
  %v531 = vadd.f32 %v404, 1.0
  %v532 = vadd.f32 %v406, 1.0
  %v533 = vadd.f32 %v408, 1.0
  %v534 = vadd.f32 %v410, 1.0
  %v535 = vadd.f32 %v412, 1.0
  %v536 = vadd.f32 %v414, 1.0
  %v537 = vadd.f32 %v416, 1.0
  %v538 = vadd.f32 %v418, 1.0
  %v539 = vadd.f32 %v420, 1.0
  %v540 = vadd.f32 %v422, 1.0
  %v541 = vadd.f32 %v424, 1.0
  %v542 = vadd.f32 %v426, 1.0
  %v543 = vadd.f32 %v428, 1.0
  %v544 = vadd.f32 %v430, 1.0
  %v545 = vadd.f32 %v432, 1.0
  %v546 = vadd.f32 %v434, 1.0
  %v547 = vadd.f32 %v436, 1.0
  %v548 = vadd.f32 %v438, 1.0
  %v549 = vadd.f32 %v440, 1.0
  %v550 = vadd.f32 %v442, 1.0
  %v551 = vrcp.pop %v443
  %v552 = vmul.f32 1.0, %v551
  %v553 = vrcp.pop %v444
  %v554 = vmul.f32 1.0, %v553
  %v555 = vrcp.pop %v445
  %v556 = vmul.f32 1.0, %v555
  %v557 = vrcp.pop %v446
  %v558 = vmul.f32 1.0, %v557
  %v559 = vrcp.pop %v447
  %v560 = vmul.f32 1.0, %v559
  %v561 = vrcp.pop %v448
  %v562 = vmul.f32 1.0, %v561
  %v563 = vrcp.pop %v449
  %v564 = vmul.f32 1.0, %v563
  %v565 = vrcp.pop %v450
  %v566 = vmul.f32 1.0, %v565
  %v567 = vrcp.pop %v451
  %v568 = vmul.f32 1.0, %v567
  %v569 = vrcp.pop %v452
  %v570 = vmul.f32 1.0, %v569
  %v571 = vrcp.pop %v453
  %v572 = vmul.f32 1.0, %v571
  %v573 = vrcp.pop %v454
  %v574 = vmul.f32 1.0, %v573
  %v575 = vrcp.pop %v455
  %v576 = vmul.f32 1.0, %v575
  %v577 = vrcp.pop %v456
  %v578 = vmul.f32 1.0, %v577
  %v579 = vrcp.pop %v457
  %v580 = vmul.f32 1.0, %v579
  %v581 = vrcp.pop %v458
  %v582 = vmul.f32 1.0, %v581
  %v583 = vrcp.pop %v459
  %v584 = vmul.f32 1.0, %v583
  %v585 = vrcp.pop %v460
  %v586 = vmul.f32 1.0, %v585
  %v587 = vrcp.pop %v461
  %v588 = vmul.f32 1.0, %v587
  %v589 = vrcp.pop %v462
  %v590 = vmul.f32 1.0, %v589
  %v591 = vrcp.pop %v463
  %v592 = vmul.f32 1.0, %v591
  %v593 = vrcp.pop %v464
  %v594 = vmul.f32 1.0, %v593
  %v595 = vrcp.pop %v465
  %v596 = vmul.f32 1.0, %v595
  %v597 = vrcp.pop %v466
  %v598 = vmul.f32 1.0, %v597
  %v599 = vrcp.pop %v467
  %v600 = vmul.f32 1.0, %v599
  %v601 = vrcp.pop %v468
  %v602 = vmul.f32 1.0, %v601
  %v603 = vrcp.pop %v469
  %v604 = vmul.f32 1.0, %v603
  %v605 = vrcp.pop %v470
  %v606 = vmul.f32 1.0, %v605
  %v607 = vrcp.pop %v471
  %v608 = vmul.f32 1.0, %v607
  %v609 = vrcp.pop %v472
  %v610 = vmul.f32 1.0, %v609
  %v611 = vrcp.pop %v473
  %v612 = vmul.f32 1.0, %v611
  %v613 = vrcp.pop %v474
  %v614 = vmul.f32 1.0, %v613
  %v615 = vrcp.pop %v475
  %v616 = vmul.f32 1.0, %v615
  %v617 = vrcp.pop %v476
  %v618 = vmul.f32 1.0, %v617
  %v619 = vrcp.pop %v477
  %v620 = vmul.f32 1.0, %v619
  %v621 = vrcp.pop %v478
  %v622 = vmul.f32 1.0, %v621
  %v623 = vrcp.pop %v479
  %v624 = vmul.f32 1.0, %v623
  %v625 = vrcp.pop %v480
  %v626 = vmul.f32 1.0, %v625
  %v627 = vrcp.pop %v481
  %v628 = vmul.f32 1.0, %v627
  %v629 = vrcp.pop %v482
  %v630 = vmul.f32 1.0, %v629
  %v631 = vrcp.pop %v483
  %v632 = vmul.f32 1.0, %v631
  %v633 = vrcp.pop %v484
  %v634 = vmul.f32 1.0, %v633
  %v635 = vrcp.pop %v485
  %v636 = vmul.f32 1.0, %v635
  %v637 = vrcp.pop %v486
  %v638 = vmul.f32 1.0, %v637
  %v639 = vrcp.pop %v487
  %v640 = vmul.f32 1.0, %v639
  %v641 = vrcp.pop %v488
  %v642 = vmul.f32 1.0, %v641
  %v643 = vrcp.pop %v489
  %v644 = vmul.f32 1.0, %v643
  %v645 = vrcp.pop %v490
  %v646 = vmul.f32 1.0, %v645
  %v647 = vrcp.pop %v491
  %v648 = vmul.f32 1.0, %v647
  %v649 = vrcp.pop %v492
  %v650 = vmul.f32 1.0, %v649
  %v651 = vrcp.pop %v493
  %v652 = vmul.f32 1.0, %v651
  %v653 = vrcp.pop %v494
  %v654 = vmul.f32 1.0, %v653
  %v655 = vrcp.pop %v495
  %v656 = vmul.f32 1.0, %v655
  %v657 = vrcp.pop %v496
  %v658 = vmul.f32 1.0, %v657
  %v659 = vrcp.pop %v497
  %v660 = vmul.f32 1.0, %v659
  %v661 = vrcp.pop %v498
  %v662 = vmul.f32 1.0, %v661
  %v663 = vrcp.pop %v499
  %v664 = vmul.f32 1.0, %v663
  %v665 = vrcp.pop %v500
  %v666 = vmul.f32 1.0, %v665
  %v667 = vrcp.pop %v501
  %v668 = vmul.f32 1.0, %v667
  %v669 = vrcp.pop %v502
  %v670 = vmul.f32 1.0, %v669
  %v671 = vrcp.pop %v503
  %v672 = vmul.f32 1.0, %v671
  %v673 = vrcp.pop %v504
  %v674 = vmul.f32 1.0, %v673
  %v675 = vrcp.pop %v505
  %v676 = vmul.f32 1.0, %v675
  %v677 = vrcp.pop %v506
  %v678 = vmul.f32 1.0, %v677
  %v679 = vrcp.pop %v507
  %v680 = vmul.f32 1.0, %v679
  %v681 = vrcp.pop %v508
  %v682 = vmul.f32 1.0, %v681
  %v683 = vrcp.pop %v509
  %v684 = vmul.f32 1.0, %v683
  %v685 = vrcp.pop %v510
  %v686 = vmul.f32 1.0, %v685
  %v687 = vrcp.pop %v511
  %v688 = vmul.f32 1.0, %v687
  %v689 = vrcp.pop %v512
  %v690 = vmul.f32 1.0, %v689
  %v691 = vrcp.pop %v513
  %v692 = vmul.f32 1.0, %v691
  %v693 = vrcp.pop %v514
  %v694 = vmul.f32 1.0, %v693
  %v695 = vrcp.pop %v515
  %v696 = vmul.f32 1.0, %v695
  %v697 = vrcp.pop %v516
  %v698 = vmul.f32 1.0, %v697
  %v699 = vrcp.pop %v517
  %v700 = vmul.f32 1.0, %v699
  %v701 = vrcp.pop %v518
  %v702 = vmul.f32 1.0, %v701
  %v703 = vrcp.pop %v519
  %v704 = vmul.f32 1.0, %v703
  %v705 = vrcp.pop %v520
  %v706 = vmul.f32 1.0, %v705
  %v707 = vrcp.pop %v521
  %v708 = vmul.f32 1.0, %v707
  %v709 = vrcp.pop %v522
  %v710 = vmul.f32 1.0, %v709
  %v711 = vrcp.pop %v523
  %v712 = vmul.f32 1.0, %v711
  %v713 = vrcp.pop %v524
  %v714 = vmul.f32 1.0, %v713
  %v715 = vrcp.pop %v525
  %v716 = vmul.f32 1.0, %v715
  %v717 = vrcp.pop %v526
  %v718 = vmul.f32 1.0, %v717
  %v719 = vrcp.pop %v527
  %v720 = vmul.f32 1.0, %v719
  %v721 = vrcp.pop %v528
  %v722 = vmul.f32 1.0, %v721
  %v723 = vrcp.pop %v529
  %v724 = vmul.f32 1.0, %v723
  %v725 = vrcp.pop %v530
  %v726 = vmul.f32 1.0, %v725
  %v727 = vrcp.pop %v531
  %v728 = vmul.f32 1.0, %v727
  %v729 = vrcp.pop %v532
  %v730 = vmul.f32 1.0, %v729
  %v731 = vrcp.pop %v533
  %v732 = vmul.f32 1.0, %v731
  %v733 = vrcp.pop %v534
  %v734 = vmul.f32 1.0, %v733
  %v735 = vrcp.pop %v535
  %v736 = vmul.f32 1.0, %v735
  %v737 = vrcp.pop %v536
  %v738 = vmul.f32 1.0, %v737
  %v739 = vrcp.pop %v537
  %v740 = vmul.f32 1.0, %v739
  %v741 = vrcp.pop %v538
  %v742 = vmul.f32 1.0, %v741
  %v743 = vrcp.pop %v539
  %v744 = vmul.f32 1.0, %v743
  %v745 = vrcp.pop %v540
  %v746 = vmul.f32 1.0, %v745
  %v747 = vrcp.pop %v541
  %v748 = vmul.f32 1.0, %v747
  %v749 = vrcp.pop %v542
  %v750 = vmul.f32 1.0, %v749
  %v751 = vrcp.pop %v543
  %v752 = vmul.f32 1.0, %v751
  %v753 = vrcp.pop %v544
  %v754 = vmul.f32 1.0, %v753
  %v755 = vrcp.pop %v545
  %v756 = vmul.f32 1.0, %v755
  %v757 = vrcp.pop %v546
  %v758 = vmul.f32 1.0, %v757
  %v759 = vrcp.pop %v547
  %v760 = vmul.f32 1.0, %v759
  %v761 = vrcp.pop %v548
  %v762 = vmul.f32 1.0, %v761
  %v763 = vrcp.pop %v549
  %v764 = vmul.f32 1.0, %v763
  %v765 = vrcp.pop %v550
  %v766 = vmul.f32 1.0, %v765
  %v767 = vld [vmem:[%s1] sm:$0xff]
  %v768 = vld [vmem:[%s1 + $0x8] sm:$0xff]
  %v769 = vld [vmem:[%s1 + $0x10] sm:$0xff]
  %v770 = vld [vmem:[%s1 + $0x18] sm:$0xff]
  %v771 = vld [vmem:[%s1 + $0x20] sm:$0xff]
  %v772 = vld [vmem:[%s1 + $0x28] sm:$0xff]
  %v773 = vld [vmem:[%s1 + $0x30] sm:$0xff]
  %v774 = vld [vmem:[%s1 + $0x38] sm:$0xff]
  %v775 = vld [vmem:[%s1 + $0x40] sm:$0xff]
  %v776 = vld [vmem:[%s1 + $0x48] sm:$0xff]
  %v777 = vld [vmem:[%s1 + $0x50] sm:$0xff]
  %v778 = vld [vmem:[%s1 + $0x58] sm:$0xff]
  %v779 = vld [vmem:[%s1 + $0x60] sm:$0xff]
  %v780 = vld [vmem:[%s1 + $0x68] sm:$0xff]
  %v781 = vld [vmem:[%s1 + $0x70] sm:$0xff]
  %v782 = vld [vmem:[%s1 + $0x78] sm:$0xff]
  %v783 = vld [vmem:[%s1 + $0x80] sm:$0xff]
  %v784 = vld [vmem:[%s1 + $0x88] sm:$0xff]
  %v785 = vld [vmem:[%s1 + $0x90] sm:$0xff]
  %v786 = vld [vmem:[%s1 + $0x98] sm:$0xff]
  %v787 = vld [vmem:[%s1 + $0xa0] sm:$0xff]
  %v788 = vld [vmem:[%s1 + $0xa8] sm:$0xff]
  %v789 = vld [vmem:[%s1 + $0xb0] sm:$0xff]
  %v790 = vld [vmem:[%s1 + $0xb8] sm:$0xff]
  %v791 = vld [vmem:[%s1 + $0xc0] sm:$0xff]
  %v792 = vld [vmem:[%s1 + $0xc8] sm:$0xff]
  %v793 = vld [vmem:[%s1 + $0xd0] sm:$0xff]
  %v794 = vld [vmem:[%s1 + $0xd8] sm:$0xff]
  %v795 = vld [vmem:[%s1 + $0xe0] sm:$0xff]
  %v796 = vld [vmem:[%s1 + $0xe8] sm:$0xff]
  %v797 = vld [vmem:[%s1 + $0xf0] sm:$0xff]
  %v798 = vld [vmem:[%s1 + $0xf8] sm:$0xff]
  %v799 = vld [vmem:[%s1 + $0x100] sm:$0xff]
  %v800 = vld [vmem:[%s1 + $0x108] sm:$0xff]
  %v801 = vld [vmem:[%s1 + $0x110] sm:$0xff]
  %v802 = vld [vmem:[%s1 + $0x118] sm:$0xff]
  %v803 = vld [vmem:[%s1 + $0x120] sm:$0xff]
  %v804 = vld [vmem:[%s1 + $0x128] sm:$0xff]
  %v805 = vld [vmem:[%s1 + $0x130] sm:$0xff]
  %v806 = vld [vmem:[%s1 + $0x138] sm:$0xff]
  %v807 = vld [vmem:[%s1 + $0x140] sm:$0xff]
  %v808 = vld [vmem:[%s1 + $0x148] sm:$0xff]
  %v809 = vld [vmem:[%s1 + $0x150] sm:$0xff]
  %v810 = vld [vmem:[%s1 + $0x158] sm:$0xff]
  %v811 = vld [vmem:[%s1 + $0x160] sm:$0xff]
  %v812 = vld [vmem:[%s1 + $0x168] sm:$0xff]
  %v813 = vld [vmem:[%s1 + $0x170] sm:$0xff]
  %v814 = vld [vmem:[%s1 + $0x178] sm:$0xff]
  %v815 = vld [vmem:[%s1 + $0x180] sm:$0xff]
  %v816 = vld [vmem:[%s1 + $0x188] sm:$0xff]
  %v817 = vld [vmem:[%s1 + $0x190] sm:$0xff]
  %v818 = vld [vmem:[%s1 + $0x198] sm:$0xff]
  %v819 = vld [vmem:[%s1 + $0x1a0] sm:$0xff]
  %v820 = vld [vmem:[%s1 + $0x1a8] sm:$0xff]
  %v821 = vld [vmem:[%s1 + $0x1b0] sm:$0xff]
  %v822 = vld [vmem:[%s1 + $0x1b8] sm:$0xff]
  %v823 = vld [vmem:[%s1 + $0x1c0] sm:$0xff]
  %v824 = vld [vmem:[%s1 + $0x1c8] sm:$0xff]
  %v825 = vld [vmem:[%s1 + $0x1d0] sm:$0xff]
  %v826 = vld [vmem:[%s1 + $0x1d8] sm:$0xff]
  %v827 = vld [vmem:[%s1 + $0x1e0] sm:$0xff]
  %v828 = vld [vmem:[%s1 + $0x1e8] sm:$0xff]
  %v829 = vld [vmem:[%s1 + $0x1f0] sm:$0xff]
  %v830 = vld [vmem:[%s1 + $0x1f8] sm:$0xff]
  %v831 = vld [vmem:[%s1 + $0x200] sm:$0xff]
  %v832 = vld [vmem:[%s1 + $0x208] sm:$0xff]
  %v833 = vld [vmem:[%s1 + $0x210] sm:$0xff]
  %v834 = vld [vmem:[%s1 + $0x218] sm:$0xff]
  %v835 = vld [vmem:[%s1 + $0x220] sm:$0xff]
  %v836 = vld [vmem:[%s1 + $0x228] sm:$0xff]
  %v837 = vld [vmem:[%s1 + $0x230] sm:$0xff]
  %v838 = vld [vmem:[%s1 + $0x238] sm:$0xff]
  %v839 = vld [vmem:[%s1 + $0x240] sm:$0xff]
  %v840 = vld [vmem:[%s1 + $0x248] sm:$0xff]
  %v841 = vld [vmem:[%s1 + $0x250] sm:$0xff]
  %v842 = vld [vmem:[%s1 + $0x258] sm:$0xff]
  %v843 = vld [vmem:[%s1 + $0x260] sm:$0xff]
  %v844 = vld [vmem:[%s1 + $0x268] sm:$0xff]
  %v845 = vld [vmem:[%s1 + $0x270] sm:$0xff]
  %v846 = vld [vmem:[%s1 + $0x278] sm:$0xff]
  %v847 = vld [vmem:[%s1 + $0x280] sm:$0xff]
  %v848 = vld [vmem:[%s1 + $0x288] sm:$0xff]
  %v849 = vld [vmem:[%s1 + $0x290] sm:$0xff]
  %v850 = vld [vmem:[%s1 + $0x298] sm:$0xff]
  %v851 = vld [vmem:[%s1 + $0x2a0] sm:$0xff]
  %v852 = vld [vmem:[%s1 + $0x2a8] sm:$0xff]
  %v853 = vld [vmem:[%s1 + $0x2b0] sm:$0xff]
  %v854 = vld [vmem:[%s1 + $0x2b8] sm:$0xff]
  %v855 = vld [vmem:[%s1 + $0x2c0] sm:$0xff]
  %v856 = vld [vmem:[%s1 + $0x2c8] sm:$0xff]
  %v857 = vld [vmem:[%s1 + $0x2d0] sm:$0xff]
  %v858 = vld [vmem:[%s1 + $0x2d8] sm:$0xff]
  %v859 = vld [vmem:[%s1 + $0x2e0] sm:$0xff]
  %v860 = vld [vmem:[%s1 + $0x2e8] sm:$0xff]
  %v861 = vld [vmem:[%s1 + $0x2f0] sm:$0xff]
  %v862 = vld [vmem:[%s1 + $0x2f8] sm:$0xff]
  %v863 = vld [vmem:[%s1 + $0x300] sm:$0xff]
  %v864 = vld [vmem:[%s1 + $0x308] sm:$0xff]
  %v865 = vld [vmem:[%s1 + $0x310] sm:$0xff]
  %v866 = vld [vmem:[%s1 + $0x318] sm:$0xff]
  %v867 = vld [vmem:[%s1 + $0x320] sm:$0xff]
  %v868 = vld [vmem:[%s1 + $0x328] sm:$0xff]
  %v869 = vld [vmem:[%s1 + $0x330] sm:$0xff]
  %v870 = vld [vmem:[%s1 + $0x338] sm:$0xff]
  %v871 = vld [vmem:[%s1 + $0x340] sm:$0xff]
  %v872 = vld [vmem:[%s1 + $0x348] sm:$0xff]
  %v873 = vld [vmem:[%s1 + $0x350] sm:$0xff]
  %v874 = vld [vmem:[%s1 + $0x358] sm:$0xff]
  %v875 = vld [vmem:[%s1 + $0x360] sm:$0xff]
  %v876 = vld [vmem:[%s1 + $0x368] sm:$0xff]
  %v877 = vld [vmem:[%s1 + $0x370] sm:$0xff]
  %v878 = vld [vmem:[%s1 + $0x378] sm:$0xff]
  %v879 = vld [vmem:[%s1 + $0x380] sm:$0xff]
  %v880 = vld [vmem:[%s1 + $0x388] sm:$0xff]
  %v881 = vld [vmem:[%s1 + $0x390] sm:$0xff]
  %v882 = vld [vmem:[%s1 + $0x398] sm:$0xff]
  %v883 = vld [vmem:[%s1 + $0x3a0] sm:$0xff]
  %v884 = vld [vmem:[%s1 + $0x3a8] sm:$0xff]
  %v885 = vld [vmem:[%s1 + $0x3b0] sm:$0xff]
  %v886 = vld [vmem:[%s1 + $0x3b8] sm:$0xff]
  %v887 = vld [vmem:[%s1 + $0x3c0] sm:$0xff]
  %v888 = vld [vmem:[%s1 + $0x3c8] sm:$0xff]
  %v889 = vld [vmem:[%s1 + $0x3d0] sm:$0xff]
  %v890 = vld [vmem:[%s1 + $0x3d8] sm:$0xff]
  %v891 = vld [vmem:[%s1 + $0x3e0] sm:$0xff]
  %v892 = vld [vmem:[%s1 + $0x3e8] sm:$0xff]
  %v893 = vld [vmem:[%s1 + $0x3f0] sm:$0xff]
  %v894 = vld [vmem:[%s1 + $0x3f8] sm:$0xff]
  %v895 = vld [vmem:[%s1 + $0x400] sm:$0xff]
  %v896 = vld [vmem:[%s1 + $0x408] sm:$0xff]
  %v897 = vld [vmem:[%s1 + $0x410] sm:$0xff]
  %v898 = vld [vmem:[%s1 + $0x418] sm:$0xff]
  %v899 = vld [vmem:[%s1 + $0x420] sm:$0xff]
  %v900 = vld [vmem:[%s1 + $0x428] sm:$0xff]
  %v901 = vld [vmem:[%s1 + $0x430] sm:$0xff]
  %v902 = vld [vmem:[%s1 + $0x438] sm:$0xff]
  %v903 = vld [vmem:[%s1 + $0x440] sm:$0xff]
  %v904 = vld [vmem:[%s1 + $0x448] sm:$0xff]
  %v905 = vld [vmem:[%s1 + $0x450] sm:$0xff]
  %v906 = vld [vmem:[%s1 + $0x458] sm:$0xff]
  %v907 = vld [vmem:[%s1 + $0x460] sm:$0xff]
  %v908 = vld [vmem:[%s1 + $0x468] sm:$0xff]
  %v909 = vld [vmem:[%s1 + $0x470] sm:$0xff]
  %v910 = vld [vmem:[%s1 + $0x478] sm:$0xff]
  %v911 = vld [vmem:[%s1 + $0x480] sm:$0xff]
  %v912 = vld [vmem:[%s1 + $0x488] sm:$0xff]
  %v913 = vld [vmem:[%s1 + $0x490] sm:$0xff]
  %v914 = vld [vmem:[%s1 + $0x498] sm:$0xff]
  %v915 = vld [vmem:[%s1 + $0x4a0] sm:$0xff]
  %v916 = vld [vmem:[%s1 + $0x4a8] sm:$0xff]
  %v917 = vld [vmem:[%s1 + $0x4b0] sm:$0xff]
  %v918 = vld [vmem:[%s1 + $0x4b8] sm:$0xff]
  %v919 = vld [vmem:[%s1 + $0x4c0] sm:$0xff]
  %v920 = vld [vmem:[%s1 + $0x4c8] sm:$0xff]
  %v921 = vld [vmem:[%s1 + $0x4d0] sm:$0xff]
  %v922 = vld [vmem:[%s1 + $0x4d8] sm:$0xff]
  %v923 = vld [vmem:[%s1 + $0x4e0] sm:$0xff]
  %v924 = vld [vmem:[%s1 + $0x4e8] sm:$0xff]
  %v925 = vld [vmem:[%s1 + $0x4f0] sm:$0xff]
  %v926 = vld [vmem:[%s1 + $0x4f8] sm:$0xff]
  %v927 = vld [vmem:[%s1 + $0x500] sm:$0xff]
  %v928 = vld [vmem:[%s1 + $0x508] sm:$0xff]
  %v929 = vld [vmem:[%s1 + $0x510] sm:$0xff]
  %v930 = vld [vmem:[%s1 + $0x518] sm:$0xff]
  %v931 = vld [vmem:[%s1 + $0x520] sm:$0xff]
  %v932 = vld [vmem:[%s1 + $0x528] sm:$0xff]
  %v933 = vld [vmem:[%s1 + $0x530] sm:$0xff]
  %v934 = vld [vmem:[%s1 + $0x538] sm:$0xff]
  %v935 = vld [vmem:[%s1 + $0x540] sm:$0xff]
  %v936 = vld [vmem:[%s1 + $0x548] sm:$0xff]
  %v937 = vld [vmem:[%s1 + $0x550] sm:$0xff]
  %v938 = vld [vmem:[%s1 + $0x558] sm:$0xff]
  %v939 = vld [vmem:[%s1 + $0x560] sm:$0xff]
  %v940 = vld [vmem:[%s1 + $0x568] sm:$0xff]
  %v941 = vld [vmem:[%s1 + $0x570] sm:$0xff]
  %v942 = vld [vmem:[%s1 + $0x578] sm:$0xff]
  %v943 = vld [vmem:[%s1 + $0x580] sm:$0xff]
  %v944 = vld [vmem:[%s1 + $0x588] sm:$0xff]
  %v945 = vld [vmem:[%s1 + $0x590] sm:$0xff]
  %v946 = vld [vmem:[%s1 + $0x598] sm:$0xff]
  %v947 = vld [vmem:[%s1 + $0x5a0] sm:$0xff]
  %v948 = vld [vmem:[%s1 + $0x5a8] sm:$0xff]
  %v949 = vld [vmem:[%s1 + $0x5b0] sm:$0xff]
  %v950 = vld [vmem:[%s1 + $0x5b8] sm:$0xff]
  %v951 = vld [vmem:[%s1 + $0x5c0] sm:$0xff]
  %v952 = vld [vmem:[%s1 + $0x5c8] sm:$0xff]
  %v953 = vld [vmem:[%s1 + $0x5d0] sm:$0xff]
  %v954 = vld [vmem:[%s1 + $0x5d8] sm:$0xff]
  %v955 = vld [vmem:[%s1 + $0x5e0] sm:$0xff]
  %v956 = vld [vmem:[%s1 + $0x5e8] sm:$0xff]
  %v957 = vld [vmem:[%s1 + $0x5f0] sm:$0xff]
  %v958 = vld [vmem:[%s1 + $0x5f8] sm:$0xff]
  %v959 = vld [vmem:[%s1 + $0x600] sm:$0xff]
  %v960 = vld [vmem:[%s1 + $0x608] sm:$0xff]
  %v961 = vld [vmem:[%s1 + $0x610] sm:$0xff]
  %v962 = vld [vmem:[%s1 + $0x618] sm:$0xff]
  %v963 = vld [vmem:[%s1 + $0x620] sm:$0xff]
  %v964 = vld [vmem:[%s1 + $0x628] sm:$0xff]
  %v965 = vld [vmem:[%s1 + $0x630] sm:$0xff]
  %v966 = vld [vmem:[%s1 + $0x638] sm:$0xff]
  %v967 = vld [vmem:[%s1 + $0x640] sm:$0xff]
  %v968 = vld [vmem:[%s1 + $0x648] sm:$0xff]
  %v969 = vld [vmem:[%s1 + $0x650] sm:$0xff]
  %v970 = vld [vmem:[%s1 + $0x658] sm:$0xff]
  %v971 = vld [vmem:[%s1 + $0x660] sm:$0xff]
  %v972 = vld [vmem:[%s1 + $0x668] sm:$0xff]
  %v973 = vld [vmem:[%s1 + $0x670] sm:$0xff]
  %v974 = vld [vmem:[%s1 + $0x678] sm:$0xff]
  %v975 = vld [vmem:[%s1 + $0x680] sm:$0xff]
  %v976 = vld [vmem:[%s1 + $0x688] sm:$0xff]
  %v977 = vld [vmem:[%s1 + $0x690] sm:$0xff]
  %v978 = vld [vmem:[%s1 + $0x698] sm:$0xff]
  %v979 = vld [vmem:[%s1 + $0x6a0] sm:$0xff]
  %v980 = vld [vmem:[%s1 + $0x6a8] sm:$0xff]
  %v981 = vld [vmem:[%s1 + $0x6b0] sm:$0xff]
  %v982 = vld [vmem:[%s1 + $0x6b8] sm:$0xff]
  %984 = vset.pattern.permute.xlu0 0
  %985 = vperm.xlu0 %984, %v552
  %v986 = vpop.permute.xlu0 %985
  %989 = vset.pattern.permute.xlu0 0
  %990 = vperm.xlu0 %989, %v554
  %v991 = vpop.permute.xlu0 %990
  %994 = vset.pattern.permute.xlu0 0
  %995 = vperm.xlu0 %994, %v556
  %v996 = vpop.permute.xlu0 %995
  %999 = vset.pattern.permute.xlu0 0
  %1000 = vperm.xlu0 %999, %v558
  %v1001 = vpop.permute.xlu0 %1000
  %1004 = vset.pattern.permute.xlu0 0
  %1005 = vperm.xlu0 %1004, %v560
  %v1006 = vpop.permute.xlu0 %1005
  %1009 = vset.pattern.permute.xlu0 0
  %1010 = vperm.xlu0 %1009, %v562
  %v1011 = vpop.permute.xlu0 %1010
  %1014 = vset.pattern.permute.xlu0 0
  %1015 = vperm.xlu0 %1014, %v564
  %v1016 = vpop.permute.xlu0 %1015
  %1019 = vset.pattern.permute.xlu0 0
  %1020 = vperm.xlu0 %1019, %v566
  %v1021 = vpop.permute.xlu0 %1020
  %1024 = vset.pattern.permute.xlu0 0
  %1025 = vperm.xlu0 %1024, %v568
  %v1026 = vpop.permute.xlu0 %1025
  %1029 = vset.pattern.permute.xlu0 0
  %1030 = vperm.xlu0 %1029, %v570
  %v1031 = vpop.permute.xlu0 %1030
  %1034 = vset.pattern.permute.xlu0 0
  %1035 = vperm.xlu0 %1034, %v572
  %v1036 = vpop.permute.xlu0 %1035
  %1039 = vset.pattern.permute.xlu0 0
  %1040 = vperm.xlu0 %1039, %v574
  %v1041 = vpop.permute.xlu0 %1040
  %1044 = vset.pattern.permute.xlu0 0
  %1045 = vperm.xlu0 %1044, %v576
  %v1046 = vpop.permute.xlu0 %1045
  %1049 = vset.pattern.permute.xlu0 0
  %1050 = vperm.xlu0 %1049, %v578
  %v1051 = vpop.permute.xlu0 %1050
  %1054 = vset.pattern.permute.xlu0 0
  %1055 = vperm.xlu0 %1054, %v580
  %v1056 = vpop.permute.xlu0 %1055
  %1059 = vset.pattern.permute.xlu0 0
  %1060 = vperm.xlu0 %1059, %v582
  %v1061 = vpop.permute.xlu0 %1060
  %1064 = vset.pattern.permute.xlu0 0
  %1065 = vperm.xlu0 %1064, %v584
  %v1066 = vpop.permute.xlu0 %1065
  %1069 = vset.pattern.permute.xlu0 0
  %1070 = vperm.xlu0 %1069, %v586
  %v1071 = vpop.permute.xlu0 %1070
  %1074 = vset.pattern.permute.xlu0 0
  %1075 = vperm.xlu0 %1074, %v588
  %v1076 = vpop.permute.xlu0 %1075
  %1079 = vset.pattern.permute.xlu0 0
  %1080 = vperm.xlu0 %1079, %v590
  %v1081 = vpop.permute.xlu0 %1080
  %1084 = vset.pattern.permute.xlu0 0
  %1085 = vperm.xlu0 %1084, %v592
  %v1086 = vpop.permute.xlu0 %1085
  %1089 = vset.pattern.permute.xlu0 0
  %1090 = vperm.xlu0 %1089, %v594
  %v1091 = vpop.permute.xlu0 %1090
  %1094 = vset.pattern.permute.xlu0 0
  %1095 = vperm.xlu0 %1094, %v596
  %v1096 = vpop.permute.xlu0 %1095
  %1099 = vset.pattern.permute.xlu0 0
  %1100 = vperm.xlu0 %1099, %v598
  %v1101 = vpop.permute.xlu0 %1100
  %1104 = vset.pattern.permute.xlu0 0
  %1105 = vperm.xlu0 %1104, %v600
  %v1106 = vpop.permute.xlu0 %1105
  %1109 = vset.pattern.permute.xlu0 0
  %1110 = vperm.xlu0 %1109, %v602
  %v1111 = vpop.permute.xlu0 %1110
  %1114 = vset.pattern.permute.xlu0 0
  %1115 = vperm.xlu0 %1114, %v604
  %v1116 = vpop.permute.xlu0 %1115
  %1119 = vset.pattern.permute.xlu0 0
  %1120 = vperm.xlu0 %1119, %v606
  %v1121 = vpop.permute.xlu0 %1120
  %1124 = vset.pattern.permute.xlu0 0
  %1125 = vperm.xlu0 %1124, %v608
  %v1126 = vpop.permute.xlu0 %1125
  %1129 = vset.pattern.permute.xlu0 0
  %1130 = vperm.xlu0 %1129, %v610
  %v1131 = vpop.permute.xlu0 %1130
  %1134 = vset.pattern.permute.xlu0 0
  %1135 = vperm.xlu0 %1134, %v612
  %v1136 = vpop.permute.xlu0 %1135
  %1139 = vset.pattern.permute.xlu0 0
  %1140 = vperm.xlu0 %1139, %v614
  %v1141 = vpop.permute.xlu0 %1140
  %1144 = vset.pattern.permute.xlu0 0
  %1145 = vperm.xlu0 %1144, %v616
  %v1146 = vpop.permute.xlu0 %1145
  %1149 = vset.pattern.permute.xlu0 0
  %1150 = vperm.xlu0 %1149, %v618
  %v1151 = vpop.permute.xlu0 %1150
  %1154 = vset.pattern.permute.xlu0 0
  %1155 = vperm.xlu0 %1154, %v620
  %v1156 = vpop.permute.xlu0 %1155
  %1159 = vset.pattern.permute.xlu0 0
  %1160 = vperm.xlu0 %1159, %v622
  %v1161 = vpop.permute.xlu0 %1160
  %1164 = vset.pattern.permute.xlu0 0
  %1165 = vperm.xlu0 %1164, %v624
  %v1166 = vpop.permute.xlu0 %1165
  %1169 = vset.pattern.permute.xlu0 0
  %1170 = vperm.xlu0 %1169, %v626
  %v1171 = vpop.permute.xlu0 %1170
  %1174 = vset.pattern.permute.xlu0 0
  %1175 = vperm.xlu0 %1174, %v628
  %v1176 = vpop.permute.xlu0 %1175
  %1179 = vset.pattern.permute.xlu0 0
  %1180 = vperm.xlu0 %1179, %v630
  %v1181 = vpop.permute.xlu0 %1180
  %1184 = vset.pattern.permute.xlu0 0
  %1185 = vperm.xlu0 %1184, %v632
  %v1186 = vpop.permute.xlu0 %1185
  %1189 = vset.pattern.permute.xlu0 0
  %1190 = vperm.xlu0 %1189, %v634
  %v1191 = vpop.permute.xlu0 %1190
  %1194 = vset.pattern.permute.xlu0 0
  %1195 = vperm.xlu0 %1194, %v636
  %v1196 = vpop.permute.xlu0 %1195
  %1199 = vset.pattern.permute.xlu0 0
  %1200 = vperm.xlu0 %1199, %v638
  %v1201 = vpop.permute.xlu0 %1200
  %1204 = vset.pattern.permute.xlu0 0
  %1205 = vperm.xlu0 %1204, %v640
  %v1206 = vpop.permute.xlu0 %1205
  %1209 = vset.pattern.permute.xlu0 0
  %1210 = vperm.xlu0 %1209, %v642
  %v1211 = vpop.permute.xlu0 %1210
  %1214 = vset.pattern.permute.xlu0 0
  %1215 = vperm.xlu0 %1214, %v644
  %v1216 = vpop.permute.xlu0 %1215
  %1219 = vset.pattern.permute.xlu0 0
  %1220 = vperm.xlu0 %1219, %v646
  %v1221 = vpop.permute.xlu0 %1220
  %1224 = vset.pattern.permute.xlu0 0
  %1225 = vperm.xlu0 %1224, %v648
  %v1226 = vpop.permute.xlu0 %1225
  %1229 = vset.pattern.permute.xlu0 0
  %1230 = vperm.xlu0 %1229, %v650
  %v1231 = vpop.permute.xlu0 %1230
  %1234 = vset.pattern.permute.xlu0 0
  %1235 = vperm.xlu0 %1234, %v652
  %v1236 = vpop.permute.xlu0 %1235
  %1239 = vset.pattern.permute.xlu0 0
  %1240 = vperm.xlu0 %1239, %v654
  %v1241 = vpop.permute.xlu0 %1240
  %1244 = vset.pattern.permute.xlu0 0
  %1245 = vperm.xlu0 %1244, %v656
  %v1246 = vpop.permute.xlu0 %1245
  %1249 = vset.pattern.permute.xlu0 0
  %1250 = vperm.xlu0 %1249, %v658
  %v1251 = vpop.permute.xlu0 %1250
  %1254 = vset.pattern.permute.xlu0 0
  %1255 = vperm.xlu0 %1254, %v660
  %v1256 = vpop.permute.xlu0 %1255
  %1259 = vset.pattern.permute.xlu0 0
  %1260 = vperm.xlu0 %1259, %v662
  %v1261 = vpop.permute.xlu0 %1260
  %1264 = vset.pattern.permute.xlu0 0
  %1265 = vperm.xlu0 %1264, %v664
  %v1266 = vpop.permute.xlu0 %1265
  %1269 = vset.pattern.permute.xlu0 0
  %1270 = vperm.xlu0 %1269, %v666
  %v1271 = vpop.permute.xlu0 %1270
  %1274 = vset.pattern.permute.xlu0 0
  %1275 = vperm.xlu0 %1274, %v668
  %v1276 = vpop.permute.xlu0 %1275
  %1279 = vset.pattern.permute.xlu0 0
  %1280 = vperm.xlu0 %1279, %v670
  %v1281 = vpop.permute.xlu0 %1280
  %1284 = vset.pattern.permute.xlu0 0
  %1285 = vperm.xlu0 %1284, %v672
  %v1286 = vpop.permute.xlu0 %1285
  %1289 = vset.pattern.permute.xlu0 0
  %1290 = vperm.xlu0 %1289, %v674
  %v1291 = vpop.permute.xlu0 %1290
  %1294 = vset.pattern.permute.xlu0 0
  %1295 = vperm.xlu0 %1294, %v676
  %v1296 = vpop.permute.xlu0 %1295
  %1299 = vset.pattern.permute.xlu0 0
  %1300 = vperm.xlu0 %1299, %v678
  %v1301 = vpop.permute.xlu0 %1300
  %1304 = vset.pattern.permute.xlu0 0
  %1305 = vperm.xlu0 %1304, %v680
  %v1306 = vpop.permute.xlu0 %1305
  %1309 = vset.pattern.permute.xlu0 0
  %1310 = vperm.xlu0 %1309, %v682
  %v1311 = vpop.permute.xlu0 %1310
  %1314 = vset.pattern.permute.xlu0 0
  %1315 = vperm.xlu0 %1314, %v684
  %v1316 = vpop.permute.xlu0 %1315
  %1319 = vset.pattern.permute.xlu0 0
  %1320 = vperm.xlu0 %1319, %v686
  %v1321 = vpop.permute.xlu0 %1320
  %1324 = vset.pattern.permute.xlu0 0
  %1325 = vperm.xlu0 %1324, %v688
  %v1326 = vpop.permute.xlu0 %1325
  %1329 = vset.pattern.permute.xlu0 0
  %1330 = vperm.xlu0 %1329, %v690
  %v1331 = vpop.permute.xlu0 %1330
  %1334 = vset.pattern.permute.xlu0 0
  %1335 = vperm.xlu0 %1334, %v692
  %v1336 = vpop.permute.xlu0 %1335
  %1339 = vset.pattern.permute.xlu0 0
  %1340 = vperm.xlu0 %1339, %v694
  %v1341 = vpop.permute.xlu0 %1340
  %1344 = vset.pattern.permute.xlu0 0
  %1345 = vperm.xlu0 %1344, %v696
  %v1346 = vpop.permute.xlu0 %1345
  %1349 = vset.pattern.permute.xlu0 0
  %1350 = vperm.xlu0 %1349, %v698
  %v1351 = vpop.permute.xlu0 %1350
  %1354 = vset.pattern.permute.xlu0 0
  %1355 = vperm.xlu0 %1354, %v700
  %v1356 = vpop.permute.xlu0 %1355
  %1359 = vset.pattern.permute.xlu0 0
  %1360 = vperm.xlu0 %1359, %v702
  %v1361 = vpop.permute.xlu0 %1360
  %1364 = vset.pattern.permute.xlu0 0
  %1365 = vperm.xlu0 %1364, %v704
  %v1366 = vpop.permute.xlu0 %1365
  %1369 = vset.pattern.permute.xlu0 0
  %1370 = vperm.xlu0 %1369, %v706
  %v1371 = vpop.permute.xlu0 %1370
  %1374 = vset.pattern.permute.xlu0 0
  %1375 = vperm.xlu0 %1374, %v708
  %v1376 = vpop.permute.xlu0 %1375
  %1379 = vset.pattern.permute.xlu0 0
  %1380 = vperm.xlu0 %1379, %v710
  %v1381 = vpop.permute.xlu0 %1380
  %1384 = vset.pattern.permute.xlu0 0
  %1385 = vperm.xlu0 %1384, %v712
  %v1386 = vpop.permute.xlu0 %1385
  %1389 = vset.pattern.permute.xlu0 0
  %1390 = vperm.xlu0 %1389, %v714
  %v1391 = vpop.permute.xlu0 %1390
  %1394 = vset.pattern.permute.xlu0 0
  %1395 = vperm.xlu0 %1394, %v716
  %v1396 = vpop.permute.xlu0 %1395
  %1399 = vset.pattern.permute.xlu0 0
  %1400 = vperm.xlu0 %1399, %v718
  %v1401 = vpop.permute.xlu0 %1400
  %1404 = vset.pattern.permute.xlu0 0
  %1405 = vperm.xlu0 %1404, %v720
  %v1406 = vpop.permute.xlu0 %1405
  %1409 = vset.pattern.permute.xlu0 0
  %1410 = vperm.xlu0 %1409, %v722
  %v1411 = vpop.permute.xlu0 %1410
  %1414 = vset.pattern.permute.xlu0 0
  %1415 = vperm.xlu0 %1414, %v724
  %v1416 = vpop.permute.xlu0 %1415
  %1419 = vset.pattern.permute.xlu0 0
  %1420 = vperm.xlu0 %1419, %v726
  %v1421 = vpop.permute.xlu0 %1420
  %1424 = vset.pattern.permute.xlu0 0
  %1425 = vperm.xlu0 %1424, %v728
  %v1426 = vpop.permute.xlu0 %1425
  %1429 = vset.pattern.permute.xlu0 0
  %1430 = vperm.xlu0 %1429, %v730
  %v1431 = vpop.permute.xlu0 %1430
  %1434 = vset.pattern.permute.xlu0 0
  %1435 = vperm.xlu0 %1434, %v732
  %v1436 = vpop.permute.xlu0 %1435
  %1439 = vset.pattern.permute.xlu0 0
  %1440 = vperm.xlu0 %1439, %v734
  %v1441 = vpop.permute.xlu0 %1440
  %1444 = vset.pattern.permute.xlu0 0
  %1445 = vperm.xlu0 %1444, %v736
  %v1446 = vpop.permute.xlu0 %1445
  %1449 = vset.pattern.permute.xlu0 0
  %1450 = vperm.xlu0 %1449, %v738
  %v1451 = vpop.permute.xlu0 %1450
  %1454 = vset.pattern.permute.xlu0 0
  %1455 = vperm.xlu0 %1454, %v740
  %v1456 = vpop.permute.xlu0 %1455
  %1459 = vset.pattern.permute.xlu0 0
  %1460 = vperm.xlu0 %1459, %v742
  %v1461 = vpop.permute.xlu0 %1460
  %1464 = vset.pattern.permute.xlu0 0
  %1465 = vperm.xlu0 %1464, %v744
  %v1466 = vpop.permute.xlu0 %1465
  %1469 = vset.pattern.permute.xlu0 0
  %1470 = vperm.xlu0 %1469, %v746
  %v1471 = vpop.permute.xlu0 %1470
  %1474 = vset.pattern.permute.xlu0 0
  %1475 = vperm.xlu0 %1474, %v748
  %v1476 = vpop.permute.xlu0 %1475
  %1479 = vset.pattern.permute.xlu0 0
  %1480 = vperm.xlu0 %1479, %v750
  %v1481 = vpop.permute.xlu0 %1480
  %1484 = vset.pattern.permute.xlu0 0
  %1485 = vperm.xlu0 %1484, %v752
  %v1486 = vpop.permute.xlu0 %1485
  %1489 = vset.pattern.permute.xlu0 0
  %1490 = vperm.xlu0 %1489, %v754
  %v1491 = vpop.permute.xlu0 %1490
  %1494 = vset.pattern.permute.xlu0 0
  %1495 = vperm.xlu0 %1494, %v756
  %v1496 = vpop.permute.xlu0 %1495
  %1499 = vset.pattern.permute.xlu0 0
  %1500 = vperm.xlu0 %1499, %v758
  %v1501 = vpop.permute.xlu0 %1500
  %1504 = vset.pattern.permute.xlu0 0
  %1505 = vperm.xlu0 %1504, %v760
  %v1506 = vpop.permute.xlu0 %1505
  %1509 = vset.pattern.permute.xlu0 0
  %1510 = vperm.xlu0 %1509, %v762
  %v1511 = vpop.permute.xlu0 %1510
  %1514 = vset.pattern.permute.xlu0 0
  %1515 = vperm.xlu0 %1514, %v764
  %v1516 = vpop.permute.xlu0 %1515
  %1519 = vset.pattern.permute.xlu0 0
  %1520 = vperm.xlu0 %1519, %v766
  %v1521 = vpop.permute.xlu0 %1520
  %v1523 = vmul.f32 %v986, %v767
  %v1524 = vmul.f32 %v986, %v768
  %v1525 = vmul.f32 %v991, %v769
  %v1526 = vmul.f32 %v991, %v770
  %v1527 = vmul.f32 %v996, %v771
  %v1528 = vmul.f32 %v996, %v772
  %v1529 = vmul.f32 %v1001, %v773
  %v1530 = vmul.f32 %v1001, %v774
  %v1531 = vmul.f32 %v1006, %v775
  %v1532 = vmul.f32 %v1006, %v776
  %v1533 = vmul.f32 %v1011, %v777
  %v1534 = vmul.f32 %v1011, %v778
  %v1535 = vmul.f32 %v1016, %v779
  %v1536 = vmul.f32 %v1016, %v780
  %v1537 = vmul.f32 %v1021, %v781
  %v1538 = vmul.f32 %v1021, %v782
  %v1539 = vmul.f32 %v1026, %v783
  %v1540 = vmul.f32 %v1026, %v784
  %v1541 = vmul.f32 %v1031, %v785
  %v1542 = vmul.f32 %v1031, %v786
  %v1543 = vmul.f32 %v1036, %v787
  %v1544 = vmul.f32 %v1036, %v788
  %v1545 = vmul.f32 %v1041, %v789
  %v1546 = vmul.f32 %v1041, %v790
  %v1547 = vmul.f32 %v1046, %v791
  %v1548 = vmul.f32 %v1046, %v792
  %v1549 = vmul.f32 %v1051, %v793
  %v1550 = vmul.f32 %v1051, %v794
  %v1551 = vmul.f32 %v1056, %v795
  %v1552 = vmul.f32 %v1056, %v796
  %v1553 = vmul.f32 %v1061, %v797
  %v1554 = vmul.f32 %v1061, %v798
  %v1555 = vmul.f32 %v1066, %v799
  %v1556 = vmul.f32 %v1066, %v800
  %v1557 = vmul.f32 %v1071, %v801
  %v1558 = vmul.f32 %v1071, %v802
  %v1559 = vmul.f32 %v1076, %v803
  %v1560 = vmul.f32 %v1076, %v804
  %v1561 = vmul.f32 %v1081, %v805
  %v1562 = vmul.f32 %v1081, %v806
  %v1563 = vmul.f32 %v1086, %v807
  %v1564 = vmul.f32 %v1086, %v808
  %v1565 = vmul.f32 %v1091, %v809
  %v1566 = vmul.f32 %v1091, %v810
  %v1567 = vmul.f32 %v1096, %v811
  %v1568 = vmul.f32 %v1096, %v812
  %v1569 = vmul.f32 %v1101, %v813
  %v1570 = vmul.f32 %v1101, %v814
  %v1571 = vmul.f32 %v1106, %v815
  %v1572 = vmul.f32 %v1106, %v816
  %v1573 = vmul.f32 %v1111, %v817
  %v1574 = vmul.f32 %v1111, %v818
  %v1575 = vmul.f32 %v1116, %v819
  %v1576 = vmul.f32 %v1116, %v820
  %v1577 = vmul.f32 %v1121, %v821
  %v1578 = vmul.f32 %v1121, %v822
  %v1579 = vmul.f32 %v1126, %v823
  %v1580 = vmul.f32 %v1126, %v824
  %v1581 = vmul.f32 %v1131, %v825
  %v1582 = vmul.f32 %v1131, %v826
  %v1583 = vmul.f32 %v1136, %v827
  %v1584 = vmul.f32 %v1136, %v828
  %v1585 = vmul.f32 %v1141, %v829
  %v1586 = vmul.f32 %v1141, %v830
  %v1587 = vmul.f32 %v1146, %v831
  %v1588 = vmul.f32 %v1146, %v832
  %v1589 = vmul.f32 %v1151, %v833
  %v1590 = vmul.f32 %v1151, %v834
  %v1591 = vmul.f32 %v1156, %v835
  %v1592 = vmul.f32 %v1156, %v836
  %v1593 = vmul.f32 %v1161, %v837
  %v1594 = vmul.f32 %v1161, %v838
  %v1595 = vmul.f32 %v1166, %v839
  %v1596 = vmul.f32 %v1166, %v840
  %v1597 = vmul.f32 %v1171, %v841
  %v1598 = vmul.f32 %v1171, %v842
  %v1599 = vmul.f32 %v1176, %v843
  %v1600 = vmul.f32 %v1176, %v844
  %v1601 = vmul.f32 %v1181, %v845
  %v1602 = vmul.f32 %v1181, %v846
  %v1603 = vmul.f32 %v1186, %v847
  %v1604 = vmul.f32 %v1186, %v848
  %v1605 = vmul.f32 %v1191, %v849
  %v1606 = vmul.f32 %v1191, %v850
  %v1607 = vmul.f32 %v1196, %v851
  %v1608 = vmul.f32 %v1196, %v852
  %v1609 = vmul.f32 %v1201, %v853
  %v1610 = vmul.f32 %v1201, %v854
  %v1611 = vmul.f32 %v1206, %v855
  %v1612 = vmul.f32 %v1206, %v856
  %v1613 = vmul.f32 %v1211, %v857
  %v1614 = vmul.f32 %v1211, %v858
  %v1615 = vmul.f32 %v1216, %v859
  %v1616 = vmul.f32 %v1216, %v860
  %v1617 = vmul.f32 %v1221, %v861
  %v1618 = vmul.f32 %v1221, %v862
  %v1619 = vmul.f32 %v1226, %v863
  %v1620 = vmul.f32 %v1226, %v864
  %v1621 = vmul.f32 %v1231, %v865
  %v1622 = vmul.f32 %v1231, %v866
  %v1623 = vmul.f32 %v1236, %v867
  %v1624 = vmul.f32 %v1236, %v868
  %v1625 = vmul.f32 %v1241, %v869
  %v1626 = vmul.f32 %v1241, %v870
  %v1627 = vmul.f32 %v1246, %v871
  %v1628 = vmul.f32 %v1246, %v872
  %v1629 = vmul.f32 %v1251, %v873
  %v1630 = vmul.f32 %v1251, %v874
  %v1631 = vmul.f32 %v1256, %v875
  %v1632 = vmul.f32 %v1256, %v876
  %v1633 = vmul.f32 %v1261, %v877
  %v1634 = vmul.f32 %v1261, %v878
  %v1635 = vmul.f32 %v1266, %v879
  %v1636 = vmul.f32 %v1266, %v880
  %v1637 = vmul.f32 %v1271, %v881
  %v1638 = vmul.f32 %v1271, %v882
  %v1639 = vmul.f32 %v1276, %v883
  %v1640 = vmul.f32 %v1276, %v884
  %v1641 = vmul.f32 %v1281, %v885
  %v1642 = vmul.f32 %v1281, %v886
  %v1643 = vmul.f32 %v1286, %v887
  %v1644 = vmul.f32 %v1286, %v888
  %v1645 = vmul.f32 %v1291, %v889
  %v1646 = vmul.f32 %v1291, %v890
  %v1647 = vmul.f32 %v1296, %v891
  %v1648 = vmul.f32 %v1296, %v892
  %v1649 = vmul.f32 %v1301, %v893
  %v1650 = vmul.f32 %v1301, %v894
  %v1651 = vmul.f32 %v1306, %v895
  %v1652 = vmul.f32 %v1306, %v896
  %v1653 = vmul.f32 %v1311, %v897
  %v1654 = vmul.f32 %v1311, %v898
  %v1655 = vmul.f32 %v1316, %v899
  %v1656 = vmul.f32 %v1316, %v900
  %v1657 = vmul.f32 %v1321, %v901
  %v1658 = vmul.f32 %v1321, %v902
  %v1659 = vmul.f32 %v1326, %v903
  %v1660 = vmul.f32 %v1326, %v904
  %v1661 = vmul.f32 %v1331, %v905
  %v1662 = vmul.f32 %v1331, %v906
  %v1663 = vmul.f32 %v1336, %v907
  %v1664 = vmul.f32 %v1336, %v908
  %v1665 = vmul.f32 %v1341, %v909
  %v1666 = vmul.f32 %v1341, %v910
  %v1667 = vmul.f32 %v1346, %v911
  %v1668 = vmul.f32 %v1346, %v912
  %v1669 = vmul.f32 %v1351, %v913
  %v1670 = vmul.f32 %v1351, %v914
  %v1671 = vmul.f32 %v1356, %v915
  %v1672 = vmul.f32 %v1356, %v916
  %v1673 = vmul.f32 %v1361, %v917
  %v1674 = vmul.f32 %v1361, %v918
  %v1675 = vmul.f32 %v1366, %v919
  %v1676 = vmul.f32 %v1366, %v920
  %v1677 = vmul.f32 %v1371, %v921
  %v1678 = vmul.f32 %v1371, %v922
  %v1679 = vmul.f32 %v1376, %v923
  %v1680 = vmul.f32 %v1376, %v924
  %v1681 = vmul.f32 %v1381, %v925
  %v1682 = vmul.f32 %v1381, %v926
  %v1683 = vmul.f32 %v1386, %v927
  %v1684 = vmul.f32 %v1386, %v928
  %v1685 = vmul.f32 %v1391, %v929
  %v1686 = vmul.f32 %v1391, %v930
  %v1687 = vmul.f32 %v1396, %v931
  %v1688 = vmul.f32 %v1396, %v932
  %v1689 = vmul.f32 %v1401, %v933
  %v1690 = vmul.f32 %v1401, %v934
  %v1691 = vmul.f32 %v1406, %v935
  %v1692 = vmul.f32 %v1406, %v936
  %v1693 = vmul.f32 %v1411, %v937
  %v1694 = vmul.f32 %v1411, %v938
  %v1695 = vmul.f32 %v1416, %v939
  %v1696 = vmul.f32 %v1416, %v940
  %v1697 = vmul.f32 %v1421, %v941
  %v1698 = vmul.f32 %v1421, %v942
  %v1699 = vmul.f32 %v1426, %v943
  %v1700 = vmul.f32 %v1426, %v944
  %v1701 = vmul.f32 %v1431, %v945
  %v1702 = vmul.f32 %v1431, %v946
  %v1703 = vmul.f32 %v1436, %v947
  %v1704 = vmul.f32 %v1436, %v948
  %v1705 = vmul.f32 %v1441, %v949
  %v1706 = vmul.f32 %v1441, %v950
  %v1707 = vmul.f32 %v1446, %v951
  %v1708 = vmul.f32 %v1446, %v952
  %v1709 = vmul.f32 %v1451, %v953
  %v1710 = vmul.f32 %v1451, %v954
  %v1711 = vmul.f32 %v1456, %v955
  %v1712 = vmul.f32 %v1456, %v956
  %v1713 = vmul.f32 %v1461, %v957
  %v1714 = vmul.f32 %v1461, %v958
  %v1715 = vmul.f32 %v1466, %v959
  %v1716 = vmul.f32 %v1466, %v960
  %v1717 = vmul.f32 %v1471, %v961
  %v1718 = vmul.f32 %v1471, %v962
  %v1719 = vmul.f32 %v1476, %v963
  %v1720 = vmul.f32 %v1476, %v964
  %v1721 = vmul.f32 %v1481, %v965
  %v1722 = vmul.f32 %v1481, %v966
  %v1723 = vmul.f32 %v1486, %v967
  %v1724 = vmul.f32 %v1486, %v968
  %v1725 = vmul.f32 %v1491, %v969
  %v1726 = vmul.f32 %v1491, %v970
  %v1727 = vmul.f32 %v1496, %v971
  %v1728 = vmul.f32 %v1496, %v972
  %v1729 = vmul.f32 %v1501, %v973
  %v1730 = vmul.f32 %v1501, %v974
  %v1731 = vmul.f32 %v1506, %v975
  %v1732 = vmul.f32 %v1506, %v976
  %v1733 = vmul.f32 %v1511, %v977
  %v1734 = vmul.f32 %v1511, %v978
  %v1735 = vmul.f32 %v1516, %v979
  %v1736 = vmul.f32 %v1516, %v980
  %v1737 = vmul.f32 %v1521, %v981
  %v1738 = vmul.f32 %v1521, %v982
  %1739 = vst [vmem:[%s2] sm:$0xff] %v1523
  %vm1740 = vcmask 556032
  %1741 = vst.msk [vmem:[%s2 + $0x8] sm:$0xff] %vm1740, %v1524
  %1742 = vst [vmem:[%s2 + $0x10] sm:$0xff] %v1525
  %1743 = vst.msk [vmem:[%s2 + $0x18] sm:$0xff] %vm1740, %v1526
  %1744 = vst [vmem:[%s2 + $0x20] sm:$0xff] %v1527
  %1745 = vst.msk [vmem:[%s2 + $0x28] sm:$0xff] %vm1740, %v1528
  %1746 = vst [vmem:[%s2 + $0x30] sm:$0xff] %v1529
  %1747 = vst.msk [vmem:[%s2 + $0x38] sm:$0xff] %vm1740, %v1530
  %1748 = vst [vmem:[%s2 + $0x40] sm:$0xff] %v1531
  %1749 = vst.msk [vmem:[%s2 + $0x48] sm:$0xff] %vm1740, %v1532
  %1750 = vst [vmem:[%s2 + $0x50] sm:$0xff] %v1533
  %1751 = vst.msk [vmem:[%s2 + $0x58] sm:$0xff] %vm1740, %v1534
  %1752 = vst [vmem:[%s2 + $0x60] sm:$0xff] %v1535
  %1753 = vst.msk [vmem:[%s2 + $0x68] sm:$0xff] %vm1740, %v1536
  %1754 = vst [vmem:[%s2 + $0x70] sm:$0xff] %v1537
  %1755 = vst.msk [vmem:[%s2 + $0x78] sm:$0xff] %vm1740, %v1538
  %1756 = vst [vmem:[%s2 + $0x80] sm:$0xff] %v1539
  %1757 = vst.msk [vmem:[%s2 + $0x88] sm:$0xff] %vm1740, %v1540
  %1758 = vst [vmem:[%s2 + $0x90] sm:$0xff] %v1541
  %1759 = vst.msk [vmem:[%s2 + $0x98] sm:$0xff] %vm1740, %v1542
  %1760 = vst [vmem:[%s2 + $0xa0] sm:$0xff] %v1543
  %1761 = vst.msk [vmem:[%s2 + $0xa8] sm:$0xff] %vm1740, %v1544
  %1762 = vst [vmem:[%s2 + $0xb0] sm:$0xff] %v1545
  %1763 = vst.msk [vmem:[%s2 + $0xb8] sm:$0xff] %vm1740, %v1546
  %1764 = vst [vmem:[%s2 + $0xc0] sm:$0xff] %v1547
  %1765 = vst.msk [vmem:[%s2 + $0xc8] sm:$0xff] %vm1740, %v1548
  %1766 = vst [vmem:[%s2 + $0xd0] sm:$0xff] %v1549
  %1767 = vst.msk [vmem:[%s2 + $0xd8] sm:$0xff] %vm1740, %v1550
  %1768 = vst [vmem:[%s2 + $0xe0] sm:$0xff] %v1551
  %1769 = vst.msk [vmem:[%s2 + $0xe8] sm:$0xff] %vm1740, %v1552
  %1770 = vst [vmem:[%s2 + $0xf0] sm:$0xff] %v1553
  %1771 = vst.msk [vmem:[%s2 + $0xf8] sm:$0xff] %vm1740, %v1554
  %1772 = vst [vmem:[%s2 + $0x100] sm:$0xff] %v1555
  %1773 = vst.msk [vmem:[%s2 + $0x108] sm:$0xff] %vm1740, %v1556
  %1774 = vst [vmem:[%s2 + $0x110] sm:$0xff] %v1557
  %1775 = vst.msk [vmem:[%s2 + $0x118] sm:$0xff] %vm1740, %v1558
  %1776 = vst [vmem:[%s2 + $0x120] sm:$0xff] %v1559
  %1777 = vst.msk [vmem:[%s2 + $0x128] sm:$0xff] %vm1740, %v1560
  %1778 = vst [vmem:[%s2 + $0x130] sm:$0xff] %v1561
  %1779 = vst.msk [vmem:[%s2 + $0x138] sm:$0xff] %vm1740, %v1562
  %1780 = vst [vmem:[%s2 + $0x140] sm:$0xff] %v1563
  %1781 = vst.msk [vmem:[%s2 + $0x148] sm:$0xff] %vm1740, %v1564
  %1782 = vst [vmem:[%s2 + $0x150] sm:$0xff] %v1565
  %1783 = vst.msk [vmem:[%s2 + $0x158] sm:$0xff] %vm1740, %v1566
  %1784 = vst [vmem:[%s2 + $0x160] sm:$0xff] %v1567
  %1785 = vst.msk [vmem:[%s2 + $0x168] sm:$0xff] %vm1740, %v1568
  %1786 = vst [vmem:[%s2 + $0x170] sm:$0xff] %v1569
  %1787 = vst.msk [vmem:[%s2 + $0x178] sm:$0xff] %vm1740, %v1570
  %1788 = vst [vmem:[%s2 + $0x180] sm:$0xff] %v1571
  %1789 = vst.msk [vmem:[%s2 + $0x188] sm:$0xff] %vm1740, %v1572
  %1790 = vst [vmem:[%s2 + $0x190] sm:$0xff] %v1573
  %1791 = vst.msk [vmem:[%s2 + $0x198] sm:$0xff] %vm1740, %v1574
  %1792 = vst [vmem:[%s2 + $0x1a0] sm:$0xff] %v1575
  %1793 = vst.msk [vmem:[%s2 + $0x1a8] sm:$0xff] %vm1740, %v1576
  %1794 = vst [vmem:[%s2 + $0x1b0] sm:$0xff] %v1577
  %1795 = vst.msk [vmem:[%s2 + $0x1b8] sm:$0xff] %vm1740, %v1578
  %1796 = vst [vmem:[%s2 + $0x1c0] sm:$0xff] %v1579
  %1797 = vst.msk [vmem:[%s2 + $0x1c8] sm:$0xff] %vm1740, %v1580
  %1798 = vst [vmem:[%s2 + $0x1d0] sm:$0xff] %v1581
  %1799 = vst.msk [vmem:[%s2 + $0x1d8] sm:$0xff] %vm1740, %v1582
  %1800 = vst [vmem:[%s2 + $0x1e0] sm:$0xff] %v1583
  %1801 = vst.msk [vmem:[%s2 + $0x1e8] sm:$0xff] %vm1740, %v1584
  %1802 = vst [vmem:[%s2 + $0x1f0] sm:$0xff] %v1585
  %1803 = vst.msk [vmem:[%s2 + $0x1f8] sm:$0xff] %vm1740, %v1586
  %1804 = vst [vmem:[%s2 + $0x200] sm:$0xff] %v1587
  %1805 = vst.msk [vmem:[%s2 + $0x208] sm:$0xff] %vm1740, %v1588
  %1806 = vst [vmem:[%s2 + $0x210] sm:$0xff] %v1589
  %1807 = vst.msk [vmem:[%s2 + $0x218] sm:$0xff] %vm1740, %v1590
  %1808 = vst [vmem:[%s2 + $0x220] sm:$0xff] %v1591
  %1809 = vst.msk [vmem:[%s2 + $0x228] sm:$0xff] %vm1740, %v1592
  %1810 = vst [vmem:[%s2 + $0x230] sm:$0xff] %v1593
  %1811 = vst.msk [vmem:[%s2 + $0x238] sm:$0xff] %vm1740, %v1594
  %1812 = vst [vmem:[%s2 + $0x240] sm:$0xff] %v1595
  %1813 = vst.msk [vmem:[%s2 + $0x248] sm:$0xff] %vm1740, %v1596
  %1814 = vst [vmem:[%s2 + $0x250] sm:$0xff] %v1597
  %1815 = vst.msk [vmem:[%s2 + $0x258] sm:$0xff] %vm1740, %v1598
  %1816 = vst [vmem:[%s2 + $0x260] sm:$0xff] %v1599
  %1817 = vst.msk [vmem:[%s2 + $0x268] sm:$0xff] %vm1740, %v1600
  %1818 = vst [vmem:[%s2 + $0x270] sm:$0xff] %v1601
  %1819 = vst.msk [vmem:[%s2 + $0x278] sm:$0xff] %vm1740, %v1602
  %1820 = vst [vmem:[%s2 + $0x280] sm:$0xff] %v1603
  %1821 = vst.msk [vmem:[%s2 + $0x288] sm:$0xff] %vm1740, %v1604
  %1822 = vst [vmem:[%s2 + $0x290] sm:$0xff] %v1605
  %1823 = vst.msk [vmem:[%s2 + $0x298] sm:$0xff] %vm1740, %v1606
  %1824 = vst [vmem:[%s2 + $0x2a0] sm:$0xff] %v1607
  %1825 = vst.msk [vmem:[%s2 + $0x2a8] sm:$0xff] %vm1740, %v1608
  %1826 = vst [vmem:[%s2 + $0x2b0] sm:$0xff] %v1609
  %1827 = vst.msk [vmem:[%s2 + $0x2b8] sm:$0xff] %vm1740, %v1610
  %1828 = vst [vmem:[%s2 + $0x2c0] sm:$0xff] %v1611
  %1829 = vst.msk [vmem:[%s2 + $0x2c8] sm:$0xff] %vm1740, %v1612
  %1830 = vst [vmem:[%s2 + $0x2d0] sm:$0xff] %v1613
  %1831 = vst.msk [vmem:[%s2 + $0x2d8] sm:$0xff] %vm1740, %v1614
  %1832 = vst [vmem:[%s2 + $0x2e0] sm:$0xff] %v1615
  %1833 = vst.msk [vmem:[%s2 + $0x2e8] sm:$0xff] %vm1740, %v1616
  %1834 = vst [vmem:[%s2 + $0x2f0] sm:$0xff] %v1617
  %1835 = vst.msk [vmem:[%s2 + $0x2f8] sm:$0xff] %vm1740, %v1618
  %1836 = vst [vmem:[%s2 + $0x300] sm:$0xff] %v1619
  %1837 = vst.msk [vmem:[%s2 + $0x308] sm:$0xff] %vm1740, %v1620
  %1838 = vst [vmem:[%s2 + $0x310] sm:$0xff] %v1621
  %1839 = vst.msk [vmem:[%s2 + $0x318] sm:$0xff] %vm1740, %v1622
  %1840 = vst [vmem:[%s2 + $0x320] sm:$0xff] %v1623
  %1841 = vst.msk [vmem:[%s2 + $0x328] sm:$0xff] %vm1740, %v1624
  %1842 = vst [vmem:[%s2 + $0x330] sm:$0xff] %v1625
  %1843 = vst.msk [vmem:[%s2 + $0x338] sm:$0xff] %vm1740, %v1626
  %1844 = vst [vmem:[%s2 + $0x340] sm:$0xff] %v1627
  %1845 = vst.msk [vmem:[%s2 + $0x348] sm:$0xff] %vm1740, %v1628
  %1846 = vst [vmem:[%s2 + $0x350] sm:$0xff] %v1629
  %1847 = vst.msk [vmem:[%s2 + $0x358] sm:$0xff] %vm1740, %v1630
  %1848 = vst [vmem:[%s2 + $0x360] sm:$0xff] %v1631
  %1849 = vst.msk [vmem:[%s2 + $0x368] sm:$0xff] %vm1740, %v1632
  %1850 = vst [vmem:[%s2 + $0x370] sm:$0xff] %v1633
  %1851 = vst.msk [vmem:[%s2 + $0x378] sm:$0xff] %vm1740, %v1634
  %1852 = vst [vmem:[%s2 + $0x380] sm:$0xff] %v1635
  %1853 = vst.msk [vmem:[%s2 + $0x388] sm:$0xff] %vm1740, %v1636
  %1854 = vst [vmem:[%s2 + $0x390] sm:$0xff] %v1637
  %1855 = vst.msk [vmem:[%s2 + $0x398] sm:$0xff] %vm1740, %v1638
  %1856 = vst [vmem:[%s2 + $0x3a0] sm:$0xff] %v1639
  %1857 = vst.msk [vmem:[%s2 + $0x3a8] sm:$0xff] %vm1740, %v1640
  %1858 = vst [vmem:[%s2 + $0x3b0] sm:$0xff] %v1641
  %1859 = vst.msk [vmem:[%s2 + $0x3b8] sm:$0xff] %vm1740, %v1642
  %1860 = vst [vmem:[%s2 + $0x3c0] sm:$0xff] %v1643
  %1861 = vst.msk [vmem:[%s2 + $0x3c8] sm:$0xff] %vm1740, %v1644
  %1862 = vst [vmem:[%s2 + $0x3d0] sm:$0xff] %v1645
  %1863 = vst.msk [vmem:[%s2 + $0x3d8] sm:$0xff] %vm1740, %v1646
  %1864 = vst [vmem:[%s2 + $0x3e0] sm:$0xff] %v1647
  %1865 = vst.msk [vmem:[%s2 + $0x3e8] sm:$0xff] %vm1740, %v1648
  %1866 = vst [vmem:[%s2 + $0x3f0] sm:$0xff] %v1649
  %1867 = vst.msk [vmem:[%s2 + $0x3f8] sm:$0xff] %vm1740, %v1650
  %1868 = vst [vmem:[%s2 + $0x400] sm:$0xff] %v1651
  %1869 = vst.msk [vmem:[%s2 + $0x408] sm:$0xff] %vm1740, %v1652
  %1870 = vst [vmem:[%s2 + $0x410] sm:$0xff] %v1653
  %1871 = vst.msk [vmem:[%s2 + $0x418] sm:$0xff] %vm1740, %v1654
  %1872 = vst [vmem:[%s2 + $0x420] sm:$0xff] %v1655
  %1873 = vst.msk [vmem:[%s2 + $0x428] sm:$0xff] %vm1740, %v1656
  %1874 = vst [vmem:[%s2 + $0x430] sm:$0xff] %v1657
  %1875 = vst.msk [vmem:[%s2 + $0x438] sm:$0xff] %vm1740, %v1658
  %1876 = vst [vmem:[%s2 + $0x440] sm:$0xff] %v1659
  %1877 = vst.msk [vmem:[%s2 + $0x448] sm:$0xff] %vm1740, %v1660
  %1878 = vst [vmem:[%s2 + $0x450] sm:$0xff] %v1661
  %1879 = vst.msk [vmem:[%s2 + $0x458] sm:$0xff] %vm1740, %v1662
  %1880 = vst [vmem:[%s2 + $0x460] sm:$0xff] %v1663
  %1881 = vst.msk [vmem:[%s2 + $0x468] sm:$0xff] %vm1740, %v1664
  %1882 = vst [vmem:[%s2 + $0x470] sm:$0xff] %v1665
  %1883 = vst.msk [vmem:[%s2 + $0x478] sm:$0xff] %vm1740, %v1666
  %1884 = vst [vmem:[%s2 + $0x480] sm:$0xff] %v1667
  %1885 = vst.msk [vmem:[%s2 + $0x488] sm:$0xff] %vm1740, %v1668
  %1886 = vst [vmem:[%s2 + $0x490] sm:$0xff] %v1669
  %1887 = vst.msk [vmem:[%s2 + $0x498] sm:$0xff] %vm1740, %v1670
  %1888 = vst [vmem:[%s2 + $0x4a0] sm:$0xff] %v1671
  %1889 = vst.msk [vmem:[%s2 + $0x4a8] sm:$0xff] %vm1740, %v1672
  %1890 = vst [vmem:[%s2 + $0x4b0] sm:$0xff] %v1673
  %1891 = vst.msk [vmem:[%s2 + $0x4b8] sm:$0xff] %vm1740, %v1674
  %1892 = vst [vmem:[%s2 + $0x4c0] sm:$0xff] %v1675
  %1893 = vst.msk [vmem:[%s2 + $0x4c8] sm:$0xff] %vm1740, %v1676
  %1894 = vst [vmem:[%s2 + $0x4d0] sm:$0xff] %v1677
  %1895 = vst.msk [vmem:[%s2 + $0x4d8] sm:$0xff] %vm1740, %v1678
  %1896 = vst [vmem:[%s2 + $0x4e0] sm:$0xff] %v1679
  %1897 = vst.msk [vmem:[%s2 + $0x4e8] sm:$0xff] %vm1740, %v1680
  %1898 = vst [vmem:[%s2 + $0x4f0] sm:$0xff] %v1681
  %1899 = vst.msk [vmem:[%s2 + $0x4f8] sm:$0xff] %vm1740, %v1682
  %1900 = vst [vmem:[%s2 + $0x500] sm:$0xff] %v1683
  %1901 = vst.msk [vmem:[%s2 + $0x508] sm:$0xff] %vm1740, %v1684
  %1902 = vst [vmem:[%s2 + $0x510] sm:$0xff] %v1685
  %1903 = vst.msk [vmem:[%s2 + $0x518] sm:$0xff] %vm1740, %v1686
  %1904 = vst [vmem:[%s2 + $0x520] sm:$0xff] %v1687
  %1905 = vst.msk [vmem:[%s2 + $0x528] sm:$0xff] %vm1740, %v1688
  %1906 = vst [vmem:[%s2 + $0x530] sm:$0xff] %v1689
  %1907 = vst.msk [vmem:[%s2 + $0x538] sm:$0xff] %vm1740, %v1690
  %1908 = vst [vmem:[%s2 + $0x540] sm:$0xff] %v1691
  %1909 = vst.msk [vmem:[%s2 + $0x548] sm:$0xff] %vm1740, %v1692
  %1910 = vst [vmem:[%s2 + $0x550] sm:$0xff] %v1693
  %1911 = vst.msk [vmem:[%s2 + $0x558] sm:$0xff] %vm1740, %v1694
  %1912 = vst [vmem:[%s2 + $0x560] sm:$0xff] %v1695
  %1913 = vst.msk [vmem:[%s2 + $0x568] sm:$0xff] %vm1740, %v1696
  %1914 = vst [vmem:[%s2 + $0x570] sm:$0xff] %v1697
  %1915 = vst.msk [vmem:[%s2 + $0x578] sm:$0xff] %vm1740, %v1698
  %1916 = vst [vmem:[%s2 + $0x580] sm:$0xff] %v1699
  %1917 = vst.msk [vmem:[%s2 + $0x588] sm:$0xff] %vm1740, %v1700
  %1918 = vst [vmem:[%s2 + $0x590] sm:$0xff] %v1701
  %1919 = vst.msk [vmem:[%s2 + $0x598] sm:$0xff] %vm1740, %v1702
  %1920 = vst [vmem:[%s2 + $0x5a0] sm:$0xff] %v1703
  %1921 = vst.msk [vmem:[%s2 + $0x5a8] sm:$0xff] %vm1740, %v1704
  %1922 = vst [vmem:[%s2 + $0x5b0] sm:$0xff] %v1705
  %1923 = vst.msk [vmem:[%s2 + $0x5b8] sm:$0xff] %vm1740, %v1706
  %1924 = vst [vmem:[%s2 + $0x5c0] sm:$0xff] %v1707
  %1925 = vst.msk [vmem:[%s2 + $0x5c8] sm:$0xff] %vm1740, %v1708
  %1926 = vst [vmem:[%s2 + $0x5d0] sm:$0xff] %v1709
  %1927 = vst.msk [vmem:[%s2 + $0x5d8] sm:$0xff] %vm1740, %v1710
  %1928 = vst [vmem:[%s2 + $0x5e0] sm:$0xff] %v1711
  %1929 = vst.msk [vmem:[%s2 + $0x5e8] sm:$0xff] %vm1740, %v1712
  %1930 = vst [vmem:[%s2 + $0x5f0] sm:$0xff] %v1713
  %1931 = vst.msk [vmem:[%s2 + $0x5f8] sm:$0xff] %vm1740, %v1714
  %1932 = vst [vmem:[%s2 + $0x600] sm:$0xff] %v1715
  %1933 = vst.msk [vmem:[%s2 + $0x608] sm:$0xff] %vm1740, %v1716
  %1934 = vst [vmem:[%s2 + $0x610] sm:$0xff] %v1717
  %1935 = vst.msk [vmem:[%s2 + $0x618] sm:$0xff] %vm1740, %v1718
  %1936 = vst [vmem:[%s2 + $0x620] sm:$0xff] %v1719
  %1937 = vst.msk [vmem:[%s2 + $0x628] sm:$0xff] %vm1740, %v1720
  %1938 = vst [vmem:[%s2 + $0x630] sm:$0xff] %v1721
  %1939 = vst.msk [vmem:[%s2 + $0x638] sm:$0xff] %vm1740, %v1722
  %1940 = vst [vmem:[%s2 + $0x640] sm:$0xff] %v1723
  %1941 = vst.msk [vmem:[%s2 + $0x648] sm:$0xff] %vm1740, %v1724
  %1942 = vst [vmem:[%s2 + $0x650] sm:$0xff] %v1725
  %1943 = vst.msk [vmem:[%s2 + $0x658] sm:$0xff] %vm1740, %v1726
  %1944 = vst [vmem:[%s2 + $0x660] sm:$0xff] %v1727
  %1945 = vst.msk [vmem:[%s2 + $0x668] sm:$0xff] %vm1740, %v1728
  %1946 = vst [vmem:[%s2 + $0x670] sm:$0xff] %v1729
  %1947 = vst.msk [vmem:[%s2 + $0x678] sm:$0xff] %vm1740, %v1730
  %1948 = vst [vmem:[%s2 + $0x680] sm:$0xff] %v1731
  %1949 = vst.msk [vmem:[%s2 + $0x688] sm:$0xff] %vm1740, %v1732
  %1950 = vst [vmem:[%s2 + $0x690] sm:$0xff] %v1733
  %1951 = vst.msk [vmem:[%s2 + $0x698] sm:$0xff] %vm1740, %v1734
  %1952 = vst [vmem:[%s2 + $0x6a0] sm:$0xff] %v1735
  %1953 = vst.msk [vmem:[%s2 + $0x6a8] sm:$0xff] %vm1740, %v1736
  %1954 = vst [vmem:[%s2 + $0x6b0] sm:$0xff] %v1737
  %1955 = vst.msk [vmem:[%s2 + $0x6b8] sm:$0xff] %vm1740, %v1738
  // Predicated region
  $region10: #{tpu_custom_call.1} parent=0 // pred_check
    _
  $region11: #{tpu_custom_call.1} parent=0 // pred_check_branch
    %1957 = sbr.rel (0) target = $region13
  $region12: #{tpu_custom_call.1} parent=0 // pred_region
    _
  $region13: #{tpu_custom_call.1} parent=0 // pred_fallthru
    _
  // Predicated region
  $region14: #{tpu_custom_call.1} parent=0 // pred_check
    _
  $region15: #{tpu_custom_call.1} parent=0 // pred_check_branch
    %1959 = sbr.rel (0) target = $region17
  $region16: #{tpu_custom_call.1} parent=0 // pred_region
    _
  $region17: #{tpu_custom_call.1} parent=0 // pred_fallthru
    _

</llo_original>
